<compile_context>
chip_gen: v7x
topology: tpu7x:2x2x1
jax: 0.10.0
libtpu: 0.0.40
codegen_flags: <defaults>
</compile_context>

<pallas_src>
import functools

import jax
import jax.numpy as jnp
from jax import lax
from jax.experimental import pallas as pl
from jax.experimental.pallas import tpu as pltpu

NC_PAD = 128  # lane-dense padded logits width


# ------------------------------ fused kernel -------------------------------- #

def _cnn_fused_kernel(lhs1_ref, w1_ref, b1_ref, w2_ref, b2_ref, w3_ref, b3_ref,
                      wfc_ref, bfc_ref, out_ref,
                      a1_ref, p2_ref, a2_ref, p3_ref):
    """One batch-block of B images per grid step.

    lhs1_ref: (B, 256, 72)  bf16 conv1 im2col patches (built in wrapper)
    w1_ref  : (72, 32)      bf16     b1_ref: (1, 32)  f32
    w2_ref  : (288, 64)     bf16     b2_ref: (1, 64)  f32
    w3_ref  : (576, 128)    bf16     b3_ref: (1, 128) f32
    wfc_ref : (128, 128)    bf16     bfc_ref:(1, 128) f32  (classes zero-padded)
    out_ref : (B, 128)      f32 logits (lane-dense)
    a1_ref  : (B, 16, 16, 32) f32   conv1 output            (VMEM scratch)
    p2_ref  : (B, 10, 10, 32) f32   zero-bordered pool1     (VMEM scratch)
    a2_ref  : (B, 8, 8, 64)   f32   conv2 output            (VMEM scratch)
    p3_ref  : (B, 6, 10, 64)  f32   zero-bordered pool2, W padded to 10 so the
                                    conv3 slabs are 8-wide sublane reads
    """
    f32, bf16 = jnp.float32, jnp.bfloat16
    B = a1_ref.shape[0]

    # ---------------- conv1: one (B*256, 72) @ (72, 32) bf16 matmul ------------ #
    xs1 = lhs1_ref[...].reshape(B * 256, 72)
    y1 = jnp.dot(xs1, w1_ref[...], preferred_element_type=f32)
    y1 = jnp.maximum(y1 + b1_ref[...], 0.0)                      # (B*256, 32) f32
    a1_ref[...] = y1.reshape(B, 16, 16, 32)

    # --------------- maxpool 2x2/2 -> (B,8,8,32); zero border strips only ------ #
    pool1 = jnp.maximum(
        jnp.maximum(a1_ref[:, pl.ds(0, 8, stride=2), pl.ds(0, 8, stride=2), :],
                    a1_ref[:, pl.ds(0, 8, stride=2), pl.ds(1, 8, stride=2), :]),
        jnp.maximum(a1_ref[:, pl.ds(1, 8, stride=2), pl.ds(0, 8, stride=2), :],
                    a1_ref[:, pl.ds(1, 8, stride=2), pl.ds(1, 8, stride=2), :]))
    zrow2 = jnp.zeros((B, 1, 10, 32), f32)
    zcol2 = jnp.zeros((B, 10, 1, 32), f32)
    p2_ref[:, 0:1, :, :] = zrow2
    p2_ref[:, 9:10, :, :] = zrow2
    p2_ref[:, :, 0:1, :] = zcol2
    p2_ref[:, :, 9:10, :] = zcol2
    p2_ref[:, 1:9, 1:9, :] = pool1

    # ---------------- conv2: im2col fold -> one (B*64, 288) matmul ------------- #
    xs2 = jnp.concatenate(
        [p2_ref[:, dy:dy + 8, dx:dx + 8, :].astype(bf16)
         for dy in range(3) for dx in range(3)], axis=-1)        # (B, 8, 8, 288)
    y2 = jnp.dot(xs2.reshape(B * 64, 288), w2_ref[...], preferred_element_type=f32)
    y2 = jnp.maximum(y2 + b2_ref[...], 0.0)                      # (B*64, 64) f32
    a2_ref[...] = y2.reshape(B, 8, 8, 64)

    # --------------- maxpool 2x2/2 -> (B,4,4,64); zero border + pad cols ------- #
    pool2 = jnp.maximum(
        jnp.maximum(a2_ref[:, pl.ds(0, 4, stride=2), pl.ds(0, 4, stride=2), :],
                    a2_ref[:, pl.ds(0, 4, stride=2), pl.ds(1, 4, stride=2), :]),
        jnp.maximum(a2_ref[:, pl.ds(1, 4, stride=2), pl.ds(0, 4, stride=2), :],
                    a2_ref[:, pl.ds(1, 4, stride=2), pl.ds(1, 4, stride=2), :]))
    zrow3 = jnp.zeros((B, 1, 10, 64), f32)
    p3_ref[:, 0:1, :, :] = zrow3
    p3_ref[:, 5:6, :, :] = zrow3
    p3_ref[:, :, 0:1, :] = jnp.zeros((B, 6, 1, 64), f32)
    p3_ref[:, :, 5:10, :] = jnp.zeros((B, 6, 5, 64), f32)
    p3_ref[:, 1:5, 1:5, :] = pool2

    # ---------------- conv3: im2col fold -> one (B*32, 576) matmul ------------- #
    # 8-wide sublane slabs (B,4,8,64): row (h, c) holds padded pixel (h+dy, c+dx);
    # rows with c < 4 are the 16 valid outputs per image, c >= 4 are junk and are
    # masked out before the global-average-pool.
    xs3 = jnp.concatenate(
        [p3_ref[:, dy:dy + 4, dx:dx + 8, :].astype(bf16)
         for dy in range(3) for dx in range(3)], axis=-1)        # (B, 4, 8, 576)
    y3 = jnp.dot(xs3.reshape(B * 32, 576), w3_ref[...], preferred_element_type=f32)
    y3 = jnp.maximum(y3 + b3_ref[...], 0.0)                      # (B*32, 128) f32

    # ------------- GAP (16 valid pixels per image) + FC head ------------------- #
    y3r = y3.reshape(B, 32, 128)
    col = lax.broadcasted_iota(jnp.int32, (B, 32, 128), 1)
    gap = jnp.sum(jnp.where((col % 8) < 4, y3r, 0.0), axis=1) * (1.0 / 16.0)
    logits = jnp.dot(gap.astype(bf16), wfc_ref[...], preferred_element_type=f32)
    out_ref[...] = logits + bfc_ref[...]                         # (B, 128)


# -------------------------------- wrapper ------------------------------------ #

@functools.partial(jax.jit, static_argnames=("block_b",))
def cnn_baseline_forward(params, x_nchw, block_b=None):
    """x_nchw: (N, 3, 16, 16) float32 -> (N, num_classes) logits."""
    N, C, H, W = x_nchw.shape
    assert (C, H, W) == (3, 16, 16), "kernel is specialized to 3x16x16 inputs"
    nc = params["w_fc"].shape[1]
    assert nc <= NC_PAD
    bf16, f32 = jnp.bfloat16, jnp.float32

    # Images per grid step: amortize per-step overhead while keeping grid >= 2
    # (so both v7x TensorCores get work).  VMEM footprint with B=8 is only a few
    # MiB even with lane padding, well under the 32 MiB limit set below.
    B = block_b if block_b is not None else max(1, min(8, N // 2))
    G = -(-N // B)
    n_pad = G * B

    # conv1 im2col in the wrapper (input is tiny; DMA overlaps with compute):
    # NCHW -> NHWC, pad spatial by 1 and channels 3 -> 8, gather 9 taps into K.
    x = jnp.transpose(x_nchw, (0, 2, 3, 1)).astype(f32)           # (N,16,16,3)
    xp = jnp.pad(x, ((0, 0), (1, 1), (1, 1), (0, 5)))             # (N,18,18,8)
    patches = jnp.concatenate(
        [xp[:, dy:dy + 16, dx:dx + 16, :] for dy in range(3) for dx in range(3)],
        axis=-1)                                                  # (N,16,16,72)
    lhs1 = patches.reshape(N, 256, 72).astype(bf16)
    if n_pad != N:
        lhs1 = jnp.pad(lhs1, ((0, n_pad - N), (0, 0), (0, 0)))

    # Weight prep (tiny, once per call): taps folded into K, bf16 operands,
    # f32 biases, FC padded to a lane-dense 128-wide output.
    w1 = jnp.pad(params["w1"], ((0, 0), (0, 0), (0, 5), (0, 0))
                 ).reshape(72, 32).astype(bf16)
    w2 = params["w2"].reshape(288, 64).astype(bf16)
    w3 = params["w3"].reshape(576, 128).astype(bf16)
    wfc = jnp.pad(params["w_fc"], ((0, 0), (0, NC_PAD - nc))).astype(bf16)
    b1 = params["b1"].reshape(1, 32).astype(f32)
    b2 = params["b2"].reshape(1, 64).astype(f32)
    b3 = params["b3"].reshape(1, 128).astype(f32)
    bfc = jnp.pad(params["b_fc"], (0, NC_PAD - nc)).reshape(1, NC_PAD).astype(f32)

    out = pl.pallas_call(
        _cnn_fused_kernel,
        out_shape=jax.ShapeDtypeStruct((G, B, NC_PAD), f32),
        grid=(G,),
        in_specs=[
            pl.BlockSpec((B, 256, 72), lambda g: (g, 0, 0)),      # conv1 patches
            pl.BlockSpec((72, 32), lambda g: (0, 0)),             # w1
            pl.BlockSpec((1, 32), lambda g: (0, 0)),              # b1
            pl.BlockSpec((288, 64), lambda g: (0, 0)),            # w2
            pl.BlockSpec((1, 64), lambda g: (0, 0)),              # b2
            pl.BlockSpec((576, 128), lambda g: (0, 0)),           # w3
            pl.BlockSpec((1, 128), lambda g: (0, 0)),             # b3
            pl.BlockSpec((128, NC_PAD), lambda g: (0, 0)),        # w_fc (padded)
            pl.BlockSpec((1, NC_PAD), lambda g: (0, 0)),          # b_fc (padded)
        ],
        out_specs=pl.BlockSpec((None, B, NC_PAD), lambda g: (g, 0, 0)),
        scratch_shapes=[
            pltpu.VMEM((B, 16, 16, 32), f32),    # conv1 out
            pltpu.VMEM((B, 10, 10, 32), f32),    # zero-bordered pool1
            pltpu.VMEM((B, 8, 8, 64), f32),      # conv2 out
            pltpu.VMEM((B, 6, 10, 64), f32),     # zero-bordered pool2 (W pad 10)
        ],
        compiler_params=pltpu.CompilerParams(
            dimension_semantics=("parallel",),
            vmem_limit_bytes=32 * 1024 * 1024),
    )(lhs1, w1, b1, w2, b2, w3, b3, wfc, bfc)

    return out.reshape(n_pad, NC_PAD)[:N, :nc]


# --------------------------- parameters / reference -------------------------- #

def init_params(key, num_classes=9):
    ks = jax.random.split(key, 8)

    def conv_param(kw, kb, cin, cout):
        bound = 1.0 / (cin * 9) ** 0.5                 # PyTorch-like uniform init
        w = jax.random.uniform(kw, (3, 3, cin, cout), jnp.float32, -bound, bound)
        b = jax.random.uniform(kb, (cout,), jnp.float32, -bound, bound)
        return w, b

    w1, b1 = conv_param(ks[0], ks[1], 3, 32)
    w2, b2 = conv_param(ks[2], ks[3], 32, 64)
    w3, b3 = conv_param(ks[4], ks[5], 64, 128)
    fb = 1.0 / 128.0 ** 0.5
    w_fc = jax.random.uniform(ks[6], (128, num_classes), jnp.float32, -fb, fb)
    b_fc = jax.random.uniform(ks[7], (num_classes,), jnp.float32, -fb, fb)
    return dict(w1=w1, b1=b1, w2=w2, b2=b2, w3=w3, b3=b3, w_fc=w_fc, b_fc=b_fc)


def _reference_forward(params, x_nchw):
    x = jnp.transpose(x_nchw, (0, 2, 3, 1)).astype(jnp.float32)
    dn = ("NHWC", "HWIO", "NHWC")

    def conv(x, w, b):
        y = lax.conv_general_dilated(x, w, (1, 1), [(1, 1), (1, 1)],
                                     dimension_numbers=dn)
        return jnp.maximum(y + b, 0.0)

    def pool(x):
        n, h, w, c = x.shape
        return x.reshape(n, h // 2, 2, w // 2, 2, c).max(axis=(2, 4))

    x = pool(conv(x, params["w1"], params["b1"]))
    x = pool(conv(x, params["w2"], params["b2"]))
    x = conv(x, params["w3"], params["b3"])
    x = jnp.mean(x, axis=(1, 2))
    return x @ params["w_fc"] + params["b_fc"]


# ----------------------------------- main ------------------------------------ #

if __name__ == "__main__":
    key = jax.random.PRNGKey(0)
    k_param, k_x1, k_x2 = jax.random.split(key, 3)
    params = init_params(k_param, num_classes=9)

    # Small test consistent with the module: batch=2, 3 channels, 16x16 (NCHW).
    x = jax.random.normal(k_x1, (2, 3, 16, 16), jnp.float32)
    out = jax.block_until_ready(cnn_baseline_forward(params, x))
    assert out.shape == (2, 9), out.shape
    ref = jax.block_until_ready(_reference_forward(params, x))
    assert jnp.allclose(out, ref, rtol=2e-2, atol=2e-2), (out, ref)

    # Batched path: several images folded into M per grid step (B=4, grid=2).
    x8 = jax.random.normal(k_x2, (8, 3, 16, 16), jnp.float32)
    out8 = jax.block_until_ready(cnn_baseline_forward(params, x8))
    assert out8.shape == (8, 9), out8.shape
    ref8 = jax.block_until_ready(_reference_forward(params, x8))
    assert jnp.allclose(out8, ref8, rtol=2e-2, atol=2e-2), (out8, ref8)

    print("KERNEL_OK")
</pallas_src>

<mosaic_0001>
module attributes {stable_mosaic.version = 11 : i64} {
  func.func @_cnn_fused_kernel(%arg0: i32, %arg1: memref<1x256x72xbf16, #tpu.memory_space<vmem>>, %arg2: memref<72x32xbf16, #tpu.memory_space<vmem>>, %arg3: memref<1x32xf32, #tpu.memory_space<vmem>>, %arg4: memref<288x64xbf16, #tpu.memory_space<vmem>>, %arg5: memref<1x64xf32, #tpu.memory_space<vmem>>, %arg6: memref<576x128xbf16, #tpu.memory_space<vmem>>, %arg7: memref<1x128xf32, #tpu.memory_space<vmem>>, %arg8: memref<128x128xbf16, #tpu.memory_space<vmem>>, %arg9: memref<1x128xf32, #tpu.memory_space<vmem>>, %arg10: memref<1x1x128xf32, #tpu.memory_space<vmem>>, %arg11: memref<1x16x16x32xf32, #tpu.memory_space<vmem>>, %arg12: memref<1x10x10x32xf32, #tpu.memory_space<vmem>>, %arg13: memref<1x8x8x64xf32, #tpu.memory_space<vmem>>, %arg14: memref<1x6x10x64xf32, #tpu.memory_space<vmem>>) attributes {dimension_semantics = [#tpu.dimension_semantics<parallel>], iteration_bounds = array<i64: 2>, scalar_prefetch = 0 : i64, scratch_operands = 4 : i64, tpu.core_type = #tpu.core_type<tc>, window_params = [{transform_indices = @transform_0, window_bounds = array<i64: 1, 256, 72>}, {pipeline_mode = #tpu.pipeline_mode<synchronous>, transform_indices = @transform_1, window_bounds = array<i64: 72, 32>}, {pipeline_mode = #tpu.pipeline_mode<synchronous>, transform_indices = @transform_2, window_bounds = array<i64: 1, 32>}, {pipeline_mode = #tpu.pipeline_mode<synchronous>, transform_indices = @transform_3, window_bounds = array<i64: 288, 64>}, {pipeline_mode = #tpu.pipeline_mode<synchronous>, transform_indices = @transform_4, window_bounds = array<i64: 1, 64>}, {pipeline_mode = #tpu.pipeline_mode<synchronous>, transform_indices = @transform_5, window_bounds = array<i64: 576, 128>}, {pipeline_mode = #tpu.pipeline_mode<synchronous>, transform_indices = @transform_6, window_bounds = array<i64: 1, 128>}, {pipeline_mode = #tpu.pipeline_mode<synchronous>, transform_indices = @transform_7, window_bounds = array<i64: 128, 128>}, {pipeline_mode = #tpu.pipeline_mode<synchronous>, transform_indices = @transform_8, window_bounds = array<i64: 1, 128>}, {transform_indices = @transform_9, window_bounds = array<i64: 1, 1, 128>}]} {
    %c0 = arith.constant 0 : index
    %c0_0 = arith.constant 0 : index
    %c0_1 = arith.constant 0 : index
    %0 = vector.load %arg1[%c0, %c0_0, %c0_1] : memref<1x256x72xbf16, #tpu.memory_space<vmem>>, vector<1x256x72xbf16>
    %1 = vector.shape_cast %0 : vector<1x256x72xbf16> to vector<256x72xbf16>
    %c0_2 = arith.constant 0 : index
    %c0_3 = arith.constant 0 : index
    %2 = vector.load %arg2[%c0_2, %c0_3] : memref<72x32xbf16, #tpu.memory_space<vmem>>, vector<72x32xbf16>
    %cst = arith.constant dense<0.000000e+00> : vector<256x32xf32>
    %3 = tpu.matmul %1, %2, %cst {dimension_numbers = #tpu.dot_dimension_numbers<[1], [0], [0], [1], [0, 0, 1, 1], [], []>} : vector<256x72xbf16>, vector<72x32xbf16>, vector<256x32xf32> -> vector<256x32xf32>
    %c0_4 = arith.constant 0 : index
    %c0_5 = arith.constant 0 : index
    %4 = vector.load %arg3[%c0_4, %c0_5] : memref<1x32xf32, #tpu.memory_space<vmem>>, vector<1x32xf32>
    %5 = vector.broadcast %4 : vector<1x32xf32> to vector<256x32xf32>
    %6 = arith.addf %3, %5 : vector<256x32xf32>
    %cst_6 = arith.constant 0.000000e+00 : f32
    %7 = vector.broadcast %cst_6 : f32 to vector<256x32xf32>
    %8 = arith.maximumf %6, %7 : vector<256x32xf32>
    %9 = vector.shape_cast %8 : vector<256x32xf32> to vector<1x16x16x32xf32>
    %c0_7 = arith.constant 0 : index
    %c0_8 = arith.constant 0 : index
    %c0_9 = arith.constant 0 : index
    %c0_10 = arith.constant 0 : index
    %10 = vector.load %arg11[%c0_7, %c0_8, %c0_9, %c0_10] : memref<1x16x16x32xf32, #tpu.memory_space<vmem>>, vector<1x16x16x32xf32>
    tpu.vector_store %arg11[%c0_7, %c0_8, %c0_9, %c0_10], %9 {strides = array<i32>} : memref<1x16x16x32xf32, #tpu.memory_space<vmem>>, vector<1x16x16x32xf32>,
    %c0_11 = arith.constant 0 : index
    %c0_12 = arith.constant 0 : index
    %c0_13 = arith.constant 0 : index
    %c0_14 = arith.constant 0 : index
    %11 = tpu.strided_load %arg11[%c0_11, %c0_12, %c0_13, %c0_14] {strides = array<i32: 1, 2, 2, 1>} : memref<1x16x16x32xf32, #tpu.memory_space<vmem>>, vector<1x8x8x32xf32>
    %c0_15 = arith.constant 0 : index
    %c0_16 = arith.constant 0 : index
    %c1 = arith.constant 1 : index
    %c0_17 = arith.constant 0 : index
    %12 = tpu.strided_load %arg11[%c0_15, %c0_16, %c1, %c0_17] {strides = array<i32: 1, 2, 2, 1>} : memref<1x16x16x32xf32, #tpu.memory_space<vmem>>, vector<1x8x8x32xf32>
    %13 = arith.maximumf %11, %12 : vector<1x8x8x32xf32>
    %c0_18 = arith.constant 0 : index
    %c1_19 = arith.constant 1 : index
    %c0_20 = arith.constant 0 : index
    %c0_21 = arith.constant 0 : index
    %14 = tpu.strided_load %arg11[%c0_18, %c1_19, %c0_20, %c0_21] {strides = array<i32: 1, 2, 2, 1>} : memref<1x16x16x32xf32, #tpu.memory_space<vmem>>, vector<1x8x8x32xf32>
    %c0_22 = arith.constant 0 : index
    %c1_23 = arith.constant 1 : index
    %c1_24 = arith.constant 1 : index
    %c0_25 = arith.constant 0 : index
    %15 = tpu.strided_load %arg11[%c0_22, %c1_23, %c1_24, %c0_25] {strides = array<i32: 1, 2, 2, 1>} : memref<1x16x16x32xf32, #tpu.memory_space<vmem>>, vector<1x8x8x32xf32>
    %16 = arith.maximumf %14, %15 : vector<1x8x8x32xf32>
    %17 = arith.maximumf %13, %16 : vector<1x8x8x32xf32>
    %cst_26 = arith.constant 0.000000e+00 : f32
    %18 = vector.broadcast %cst_26 : f32 to vector<1x1x10x32xf32>
    %cst_27 = arith.constant 0.000000e+00 : f32
    %19 = vector.broadcast %cst_27 : f32 to vector<1x10x1x32xf32>
    %c0_28 = arith.constant 0 : index
    %c0_29 = arith.constant 0 : index
    %c0_30 = arith.constant 0 : index
    %c0_31 = arith.constant 0 : index
    %20 = vector.load %arg12[%c0_28, %c0_29, %c0_30, %c0_31] : memref<1x10x10x32xf32, #tpu.memory_space<vmem>>, vector<1x1x10x32xf32>
    tpu.vector_store %arg12[%c0_28, %c0_29, %c0_30, %c0_31], %18 {strides = array<i32>} : memref<1x10x10x32xf32, #tpu.memory_space<vmem>>, vector<1x1x10x32xf32>,
    %c0_32 = arith.constant 0 : index
    %c9 = arith.constant 9 : index
    %c0_33 = arith.constant 0 : index
    %c0_34 = arith.constant 0 : index
    %21 = vector.load %arg12[%c0_32, %c9, %c0_33, %c0_34] : memref<1x10x10x32xf32, #tpu.memory_space<vmem>>, vector<1x1x10x32xf32>
    tpu.vector_store %arg12[%c0_32, %c9, %c0_33, %c0_34], %18 {strides = array<i32>} : memref<1x10x10x32xf32, #tpu.memory_space<vmem>>, vector<1x1x10x32xf32>,
    %c0_35 = arith.constant 0 : index
    %c0_36 = arith.constant 0 : index
    %c0_37 = arith.constant 0 : index
    %c0_38 = arith.constant 0 : index
    %22 = vector.load %arg12[%c0_35, %c0_36, %c0_37, %c0_38] : memref<1x10x10x32xf32, #tpu.memory_space<vmem>>, vector<1x10x1x32xf32>
    tpu.vector_store %arg12[%c0_35, %c0_36, %c0_37, %c0_38], %19 {strides = array<i32>} : memref<1x10x10x32xf32, #tpu.memory_space<vmem>>, vector<1x10x1x32xf32>,
    %c0_39 = arith.constant 0 : index
    %c0_40 = arith.constant 0 : index
    %c9_41 = arith.constant 9 : index
    %c0_42 = arith.constant 0 : index
    %23 = vector.load %arg12[%c0_39, %c0_40, %c9_41, %c0_42] : memref<1x10x10x32xf32, #tpu.memory_space<vmem>>, vector<1x10x1x32xf32>
    tpu.vector_store %arg12[%c0_39, %c0_40, %c9_41, %c0_42], %19 {strides = array<i32>} : memref<1x10x10x32xf32, #tpu.memory_space<vmem>>, vector<1x10x1x32xf32>,
    %c0_43 = arith.constant 0 : index
    %c1_44 = arith.constant 1 : index
    %c1_45 = arith.constant 1 : index
    %c0_46 = arith.constant 0 : index
    %24 = vector.load %arg12[%c0_43, %c1_44, %c1_45, %c0_46] : memref<1x10x10x32xf32, #tpu.memory_space<vmem>>, vector<1x8x8x32xf32>
    tpu.vector_store %arg12[%c0_43, %c1_44, %c1_45, %c0_46], %17 {strides = array<i32>} : memref<1x10x10x32xf32, #tpu.memory_space<vmem>>, vector<1x8x8x32xf32>,
    %c0_47 = arith.constant 0 : index
    %c0_48 = arith.constant 0 : index
    %c0_49 = arith.constant 0 : index
    %c0_50 = arith.constant 0 : index
    %25 = vector.load %arg12[%c0_47, %c0_48, %c0_49, %c0_50] : memref<1x10x10x32xf32, #tpu.memory_space<vmem>>, vector<1x8x8x32xf32>
    %26 = arith.truncf %25 : vector<1x8x8x32xf32> to vector<1x8x8x32xbf16>
    %c0_51 = arith.constant 0 : index
    %c0_52 = arith.constant 0 : index
    %c1_53 = arith.constant 1 : index
    %c0_54 = arith.constant 0 : index
    %27 = vector.load %arg12[%c0_51, %c0_52, %c1_53, %c0_54] : memref<1x10x10x32xf32, #tpu.memory_space<vmem>>, vector<1x8x8x32xf32>
    %28 = arith.truncf %27 : vector<1x8x8x32xf32> to vector<1x8x8x32xbf16>
    %c0_55 = arith.constant 0 : index
    %c0_56 = arith.constant 0 : index
    %c2 = arith.constant 2 : index
    %c0_57 = arith.constant 0 : index
    %29 = vector.load %arg12[%c0_55, %c0_56, %c2, %c0_57] : memref<1x10x10x32xf32, #tpu.memory_space<vmem>>, vector<1x8x8x32xf32>
    %30 = arith.truncf %29 : vector<1x8x8x32xf32> to vector<1x8x8x32xbf16>
    %c0_58 = arith.constant 0 : index
    %c1_59 = arith.constant 1 : index
    %c0_60 = arith.constant 0 : index
    %c0_61 = arith.constant 0 : index
    %31 = vector.load %arg12[%c0_58, %c1_59, %c0_60, %c0_61] : memref<1x10x10x32xf32, #tpu.memory_space<vmem>>, vector<1x8x8x32xf32>
    %32 = arith.truncf %31 : vector<1x8x8x32xf32> to vector<1x8x8x32xbf16>
    %c0_62 = arith.constant 0 : index
    %c1_63 = arith.constant 1 : index
    %c1_64 = arith.constant 1 : index
    %c0_65 = arith.constant 0 : index
    %33 = vector.load %arg12[%c0_62, %c1_63, %c1_64, %c0_65] : memref<1x10x10x32xf32, #tpu.memory_space<vmem>>, vector<1x8x8x32xf32>
    %34 = arith.truncf %33 : vector<1x8x8x32xf32> to vector<1x8x8x32xbf16>
    %c0_66 = arith.constant 0 : index
    %c1_67 = arith.constant 1 : index
    %c2_68 = arith.constant 2 : index
    %c0_69 = arith.constant 0 : index
    %35 = vector.load %arg12[%c0_66, %c1_67, %c2_68, %c0_69] : memref<1x10x10x32xf32, #tpu.memory_space<vmem>>, vector<1x8x8x32xf32>
    %36 = arith.truncf %35 : vector<1x8x8x32xf32> to vector<1x8x8x32xbf16>
    %c0_70 = arith.constant 0 : index
    %c2_71 = arith.constant 2 : index
    %c0_72 = arith.constant 0 : index
    %c0_73 = arith.constant 0 : index
    %37 = vector.load %arg12[%c0_70, %c2_71, %c0_72, %c0_73] : memref<1x10x10x32xf32, #tpu.memory_space<vmem>>, vector<1x8x8x32xf32>
    %38 = arith.truncf %37 : vector<1x8x8x32xf32> to vector<1x8x8x32xbf16>
    %c0_74 = arith.constant 0 : index
    %c2_75 = arith.constant 2 : index
    %c1_76 = arith.constant 1 : index
    %c0_77 = arith.constant 0 : index
    %39 = vector.load %arg12[%c0_74, %c2_75, %c1_76, %c0_77] : memref<1x10x10x32xf32, #tpu.memory_space<vmem>>, vector<1x8x8x32xf32>
    %40 = arith.truncf %39 : vector<1x8x8x32xf32> to vector<1x8x8x32xbf16>
    %c0_78 = arith.constant 0 : index
    %c2_79 = arith.constant 2 : index
    %c2_80 = arith.constant 2 : index
    %c0_81 = arith.constant 0 : index
    %41 = vector.load %arg12[%c0_78, %c2_79, %c2_80, %c0_81] : memref<1x10x10x32xf32, #tpu.memory_space<vmem>>, vector<1x8x8x32xf32>
    %42 = arith.truncf %41 : vector<1x8x8x32xf32> to vector<1x8x8x32xbf16>
    %43 = tpu.concatenate %26, %28, %30, %32, %34, %36, %38, %40, %42 in 3 : vector<1x8x8x32xbf16>, vector<1x8x8x32xbf16>, vector<1x8x8x32xbf16>, vector<1x8x8x32xbf16>, vector<1x8x8x32xbf16>, vector<1x8x8x32xbf16>, vector<1x8x8x32xbf16>, vector<1x8x8x32xbf16>, vector<1x8x8x32xbf16> -> vector<1x8x8x288xbf16>
    %44 = vector.shape_cast %43 : vector<1x8x8x288xbf16> to vector<64x288xbf16>
    %c0_82 = arith.constant 0 : index
    %c0_83 = arith.constant 0 : index
    %45 = vector.load %arg4[%c0_82, %c0_83] : memref<288x64xbf16, #tpu.memory_space<vmem>>, vector<288x64xbf16>
    %cst_84 = arith.constant dense<0.000000e+00> : vector<64x64xf32>
    %46 = tpu.matmul %44, %45, %cst_84 {dimension_numbers = #tpu.dot_dimension_numbers<[1], [0], [0], [1], [0, 0, 1, 1], [], []>} : vector<64x288xbf16>, vector<288x64xbf16>, vector<64x64xf32> -> vector<64x64xf32>
    %c0_85 = arith.constant 0 : index
    %c0_86 = arith.constant 0 : index
    %47 = vector.load %arg5[%c0_85, %c0_86] : memref<1x64xf32, #tpu.memory_space<vmem>>, vector<1x64xf32>
    %48 = vector.broadcast %47 : vector<1x64xf32> to vector<64x64xf32>
    %49 = arith.addf %46, %48 : vector<64x64xf32>
    %cst_87 = arith.constant 0.000000e+00 : f32
    %50 = vector.broadcast %cst_87 : f32 to vector<64x64xf32>
    %51 = arith.maximumf %49, %50 : vector<64x64xf32>
    %52 = vector.shape_cast %51 : vector<64x64xf32> to vector<1x8x8x64xf32>
    %c0_88 = arith.constant 0 : index
    %c0_89 = arith.constant 0 : index
    %c0_90 = arith.constant 0 : index
    %c0_91 = arith.constant 0 : index
    %53 = vector.load %arg13[%c0_88, %c0_89, %c0_90, %c0_91] : memref<1x8x8x64xf32, #tpu.memory_space<vmem>>, vector<1x8x8x64xf32>
    tpu.vector_store %arg13[%c0_88, %c0_89, %c0_90, %c0_91], %52 {strides = array<i32>} : memref<1x8x8x64xf32, #tpu.memory_space<vmem>>, vector<1x8x8x64xf32>,
    %c0_92 = arith.constant 0 : index
    %c0_93 = arith.constant 0 : index
    %c0_94 = arith.constant 0 : index
    %c0_95 = arith.constant 0 : index
    %54 = tpu.strided_load %arg13[%c0_92, %c0_93, %c0_94, %c0_95] {strides = array<i32: 1, 2, 2, 1>} : memref<1x8x8x64xf32, #tpu.memory_space<vmem>>, vector<1x4x4x64xf32>
    %c0_96 = arith.constant 0 : index
    %c0_97 = arith.constant 0 : index
    %c1_98 = arith.constant 1 : index
    %c0_99 = arith.constant 0 : index
    %55 = tpu.strided_load %arg13[%c0_96, %c0_97, %c1_98, %c0_99] {strides = array<i32: 1, 2, 2, 1>} : memref<1x8x8x64xf32, #tpu.memory_space<vmem>>, vector<1x4x4x64xf32>
    %56 = arith.maximumf %54, %55 : vector<1x4x4x64xf32>
    %c0_100 = arith.constant 0 : index
    %c1_101 = arith.constant 1 : index
    %c0_102 = arith.constant 0 : index
    %c0_103 = arith.constant 0 : index
    %57 = tpu.strided_load %arg13[%c0_100, %c1_101, %c0_102, %c0_103] {strides = array<i32: 1, 2, 2, 1>} : memref<1x8x8x64xf32, #tpu.memory_space<vmem>>, vector<1x4x4x64xf32>
    %c0_104 = arith.constant 0 : index
    %c1_105 = arith.constant 1 : index
    %c1_106 = arith.constant 1 : index
    %c0_107 = arith.constant 0 : index
    %58 = tpu.strided_load %arg13[%c0_104, %c1_105, %c1_106, %c0_107] {strides = array<i32: 1, 2, 2, 1>} : memref<1x8x8x64xf32, #tpu.memory_space<vmem>>, vector<1x4x4x64xf32>
    %59 = arith.maximumf %57, %58 : vector<1x4x4x64xf32>
    %60 = arith.maximumf %56, %59 : vector<1x4x4x64xf32>
    %cst_108 = arith.constant 0.000000e+00 : f32
    %61 = vector.broadcast %cst_108 : f32 to vector<1x1x10x64xf32>
    %c0_109 = arith.constant 0 : index
    %c0_110 = arith.constant 0 : index
    %c0_111 = arith.constant 0 : index
    %c0_112 = arith.constant 0 : index
    %62 = vector.load %arg14[%c0_109, %c0_110, %c0_111, %c0_112] : memref<1x6x10x64xf32, #tpu.memory_space<vmem>>, vector<1x1x10x64xf32>
    tpu.vector_store %arg14[%c0_109, %c0_110, %c0_111, %c0_112], %61 {strides = array<i32>} : memref<1x6x10x64xf32, #tpu.memory_space<vmem>>, vector<1x1x10x64xf32>,
    %c0_113 = arith.constant 0 : index
    %c5 = arith.constant 5 : index
    %c0_114 = arith.constant 0 : index
    %c0_115 = arith.constant 0 : index
    %63 = vector.load %arg14[%c0_113, %c5, %c0_114, %c0_115] : memref<1x6x10x64xf32, #tpu.memory_space<vmem>>, vector<1x1x10x64xf32>
    tpu.vector_store %arg14[%c0_113, %c5, %c0_114, %c0_115], %61 {strides = array<i32>} : memref<1x6x10x64xf32, #tpu.memory_space<vmem>>, vector<1x1x10x64xf32>,
    %cst_116 = arith.constant 0.000000e+00 : f32
    %64 = vector.broadcast %cst_116 : f32 to vector<1x6x1x64xf32>
    %c0_117 = arith.constant 0 : index
    %c0_118 = arith.constant 0 : index
    %c0_119 = arith.constant 0 : index
    %c0_120 = arith.constant 0 : index
    %65 = vector.load %arg14[%c0_117, %c0_118, %c0_119, %c0_120] : memref<1x6x10x64xf32, #tpu.memory_space<vmem>>, vector<1x6x1x64xf32>
    tpu.vector_store %arg14[%c0_117, %c0_118, %c0_119, %c0_120], %64 {strides = array<i32>} : memref<1x6x10x64xf32, #tpu.memory_space<vmem>>, vector<1x6x1x64xf32>,
    %cst_121 = arith.constant 0.000000e+00 : f32
    %66 = vector.broadcast %cst_121 : f32 to vector<1x6x5x64xf32>
    %c0_122 = arith.constant 0 : index
    %c0_123 = arith.constant 0 : index
    %c5_124 = arith.constant 5 : index
    %c0_125 = arith.constant 0 : index
    %67 = vector.load %arg14[%c0_122, %c0_123, %c5_124, %c0_125] : memref<1x6x10x64xf32, #tpu.memory_space<vmem>>, vector<1x6x5x64xf32>
    tpu.vector_store %arg14[%c0_122, %c0_123, %c5_124, %c0_125], %66 {strides = array<i32>} : memref<1x6x10x64xf32, #tpu.memory_space<vmem>>, vector<1x6x5x64xf32>,
    %c0_126 = arith.constant 0 : index
    %c1_127 = arith.constant 1 : index
    %c1_128 = arith.constant 1 : index
    %c0_129 = arith.constant 0 : index
    %68 = vector.load %arg14[%c0_126, %c1_127, %c1_128, %c0_129] : memref<1x6x10x64xf32, #tpu.memory_space<vmem>>, vector<1x4x4x64xf32>
    tpu.vector_store %arg14[%c0_126, %c1_127, %c1_128, %c0_129], %60 {strides = array<i32>} : memref<1x6x10x64xf32, #tpu.memory_space<vmem>>, vector<1x4x4x64xf32>,
    %c0_130 = arith.constant 0 : index
    %c0_131 = arith.constant 0 : index
    %c0_132 = arith.constant 0 : index
    %c0_133 = arith.constant 0 : index
    %69 = vector.load %arg14[%c0_130, %c0_131, %c0_132, %c0_133] : memref<1x6x10x64xf32, #tpu.memory_space<vmem>>, vector<1x4x8x64xf32>
    %70 = arith.truncf %69 : vector<1x4x8x64xf32> to vector<1x4x8x64xbf16>
    %c0_134 = arith.constant 0 : index
    %c0_135 = arith.constant 0 : index
    %c1_136 = arith.constant 1 : index
    %c0_137 = arith.constant 0 : index
    %71 = vector.load %arg14[%c0_134, %c0_135, %c1_136, %c0_137] : memref<1x6x10x64xf32, #tpu.memory_space<vmem>>, vector<1x4x8x64xf32>
    %72 = arith.truncf %71 : vector<1x4x8x64xf32> to vector<1x4x8x64xbf16>
    %c0_138 = arith.constant 0 : index
    %c0_139 = arith.constant 0 : index
    %c2_140 = arith.constant 2 : index
    %c0_141 = arith.constant 0 : index
    %73 = vector.load %arg14[%c0_138, %c0_139, %c2_140, %c0_141] : memref<1x6x10x64xf32, #tpu.memory_space<vmem>>, vector<1x4x8x64xf32>
    %74 = arith.truncf %73 : vector<1x4x8x64xf32> to vector<1x4x8x64xbf16>
    %c0_142 = arith.constant 0 : index
    %c1_143 = arith.constant 1 : index
    %c0_144 = arith.constant 0 : index
    %c0_145 = arith.constant 0 : index
    %75 = vector.load %arg14[%c0_142, %c1_143, %c0_144, %c0_145] : memref<1x6x10x64xf32, #tpu.memory_space<vmem>>, vector<1x4x8x64xf32>
    %76 = arith.truncf %75 : vector<1x4x8x64xf32> to vector<1x4x8x64xbf16>
    %c0_146 = arith.constant 0 : index
    %c1_147 = arith.constant 1 : index
    %c1_148 = arith.constant 1 : index
    %c0_149 = arith.constant 0 : index
    %77 = vector.load %arg14[%c0_146, %c1_147, %c1_148, %c0_149] : memref<1x6x10x64xf32, #tpu.memory_space<vmem>>, vector<1x4x8x64xf32>
    %78 = arith.truncf %77 : vector<1x4x8x64xf32> to vector<1x4x8x64xbf16>
    %c0_150 = arith.constant 0 : index
    %c1_151 = arith.constant 1 : index
    %c2_152 = arith.constant 2 : index
    %c0_153 = arith.constant 0 : index
    %79 = vector.load %arg14[%c0_150, %c1_151, %c2_152, %c0_153] : memref<1x6x10x64xf32, #tpu.memory_space<vmem>>, vector<1x4x8x64xf32>
    %80 = arith.truncf %79 : vector<1x4x8x64xf32> to vector<1x4x8x64xbf16>
    %c0_154 = arith.constant 0 : index
    %c2_155 = arith.constant 2 : index
    %c0_156 = arith.constant 0 : index
    %c0_157 = arith.constant 0 : index
    %81 = vector.load %arg14[%c0_154, %c2_155, %c0_156, %c0_157] : memref<1x6x10x64xf32, #tpu.memory_space<vmem>>, vector<1x4x8x64xf32>
    %82 = arith.truncf %81 : vector<1x4x8x64xf32> to vector<1x4x8x64xbf16>
    %c0_158 = arith.constant 0 : index
    %c2_159 = arith.constant 2 : index
    %c1_160 = arith.constant 1 : index
    %c0_161 = arith.constant 0 : index
    %83 = vector.load %arg14[%c0_158, %c2_159, %c1_160, %c0_161] : memref<1x6x10x64xf32, #tpu.memory_space<vmem>>, vector<1x4x8x64xf32>
    %84 = arith.truncf %83 : vector<1x4x8x64xf32> to vector<1x4x8x64xbf16>
    %c0_162 = arith.constant 0 : index
    %c2_163 = arith.constant 2 : index
    %c2_164 = arith.constant 2 : index
    %c0_165 = arith.constant 0 : index
    %85 = vector.load %arg14[%c0_162, %c2_163, %c2_164, %c0_165] : memref<1x6x10x64xf32, #tpu.memory_space<vmem>>, vector<1x4x8x64xf32>
    %86 = arith.truncf %85 : vector<1x4x8x64xf32> to vector<1x4x8x64xbf16>
    %87 = tpu.concatenate %70, %72, %74, %76, %78, %80, %82, %84, %86 in 3 : vector<1x4x8x64xbf16>, vector<1x4x8x64xbf16>, vector<1x4x8x64xbf16>, vector<1x4x8x64xbf16>, vector<1x4x8x64xbf16>, vector<1x4x8x64xbf16>, vector<1x4x8x64xbf16>, vector<1x4x8x64xbf16>, vector<1x4x8x64xbf16> -> vector<1x4x8x576xbf16>
    %88 = vector.shape_cast %87 : vector<1x4x8x576xbf16> to vector<32x576xbf16>
    %c0_166 = arith.constant 0 : index
    %c0_167 = arith.constant 0 : index
    %89 = vector.load %arg6[%c0_166, %c0_167] : memref<576x128xbf16, #tpu.memory_space<vmem>>, vector<576x128xbf16>
    %cst_168 = arith.constant dense<0.000000e+00> : vector<32x128xf32>
    %90 = tpu.matmul %88, %89, %cst_168 {dimension_numbers = #tpu.dot_dimension_numbers<[1], [0], [0], [1], [0, 0, 1, 1], [], []>} : vector<32x576xbf16>, vector<576x128xbf16>, vector<32x128xf32> -> vector<32x128xf32>
    %c0_169 = arith.constant 0 : index
    %c0_170 = arith.constant 0 : index
    %91 = vector.load %arg7[%c0_169, %c0_170] : memref<1x128xf32, #tpu.memory_space<vmem>>, vector<1x128xf32>
    %92 = vector.broadcast %91 : vector<1x128xf32> to vector<32x128xf32>
    %93 = arith.addf %90, %92 : vector<32x128xf32>
    %cst_171 = arith.constant 0.000000e+00 : f32
    %94 = vector.broadcast %cst_171 : f32 to vector<32x128xf32>
    %95 = arith.maximumf %93, %94 : vector<32x128xf32>
    %96 = vector.shape_cast %95 : vector<32x128xf32> to vector<1x32x128xf32>
    %97 = tpu.iota {dimensions = array<i32: 1>} : vector<1x32x128xi32>
    %c8_i32 = arith.constant 8 : i32
    %c0_i32 = arith.constant 0 : i32
    %98 = arith.cmpi eq, %c8_i32, %c0_i32 : i32
    %c1_i32 = arith.constant 1 : i32
    %99 = arith.select %98, %c1_i32, %c8_i32 : i32
    %100 = vector.broadcast %99 : i32 to vector<1x32x128xi32>
    %101 = arith.remsi %97, %100 : vector<1x32x128xi32>
    %c0_i32_172 = arith.constant 0 : i32
    %102 = vector.broadcast %c0_i32_172 : i32 to vector<1x32x128xi32>
    %103 = arith.cmpi ne, %101, %102 : vector<1x32x128xi32>
    %c0_i32_173 = arith.constant 0 : i32
    %104 = vector.broadcast %c0_i32_173 : i32 to vector<1x32x128xi32>
    %105 = arith.cmpi slt, %101, %104 : vector<1x32x128xi32>
    %c0_i32_174 = arith.constant 0 : i32
    %106 = arith.cmpi slt, %99, %c0_i32_174 : i32
    %107 = vector.broadcast %106 : i1 to vector<1x32x128xi1>
    %108 = vector.broadcast %107 : vector<1x32x128xi1> to vector<1x32x128xi1>
    %109 = arith.xori %105, %108 : vector<1x32x128xi1>
    %110 = arith.andi %109, %103 : vector<1x32x128xi1>
    %111 = vector.broadcast %99 : i32 to vector<1x32x128xi32>
    %112 = arith.addi %101, %111 : vector<1x32x128xi32>
    %113 = arith.select %110, %112, %101 : vector<1x32x128xi1>, vector<1x32x128xi32>
    %c4_i32 = arith.constant 4 : i32
    %114 = vector.broadcast %c4_i32 : i32 to vector<1x32x128xi32>
    %115 = arith.cmpi slt, %113, %114 : vector<1x32x128xi32>
    %cst_175 = arith.constant 0.000000e+00 : f32
    %116 = vector.broadcast %cst_175 : f32 to vector<1x32x128xf32>
    %117 = arith.select %115, %96, %116 : vector<1x32x128xi1>, vector<1x32x128xf32>
    %cst_176 = arith.constant dense<0.000000e+00> : vector<1x128xf32>
    %118 = vector.multi_reduction <add>, %117, %cst_176 [1] : vector<1x32x128xf32> to vector<1x128xf32>
    %cst_177 = arith.constant 6.250000e-02 : f32
    %119 = vector.broadcast %cst_177 : f32 to vector<1x128xf32>
    %120 = arith.mulf %118, %119 : vector<1x128xf32>
    %121 = arith.truncf %120 : vector<1x128xf32> to vector<1x128xbf16>
    %c0_178 = arith.constant 0 : index
    %c0_179 = arith.constant 0 : index
    %122 = vector.load %arg8[%c0_178, %c0_179] : memref<128x128xbf16, #tpu.memory_space<vmem>>, vector<128x128xbf16>
    %cst_180 = arith.constant dense<0.000000e+00> : vector<1x128xf32>
    %123 = tpu.matmul %121, %122, %cst_180 {dimension_numbers = #tpu.dot_dimension_numbers<[1], [0], [0], [1], [0, 0, 1, 1], [], []>} : vector<1x128xbf16>, vector<128x128xbf16>, vector<1x128xf32> -> vector<1x128xf32>
    %c0_181 = arith.constant 0 : index
    %c0_182 = arith.constant 0 : index
    %124 = vector.load %arg9[%c0_181, %c0_182] : memref<1x128xf32, #tpu.memory_space<vmem>>, vector<1x128xf32>
    %125 = arith.addf %123, %124 : vector<1x128xf32>
    %c0_183 = arith.constant 0 : index
    %c0_184 = arith.constant 0 : index
    %c0_185 = arith.constant 0 : index
    %126 = vector.load %arg10[%c0_183, %c0_184, %c0_185] : memref<1x1x128xf32, #tpu.memory_space<vmem>>, vector<1x1x128xf32>
    %127 = vector.shape_cast %126 : vector<1x1x128xf32> to vector<1x128xf32>
    %128 = vector.shape_cast %125 : vector<1x128xf32> to vector<1x1x128xf32>
    tpu.vector_store %arg10[%c0_183, %c0_184, %c0_185], %128 {strides = array<i32>} : memref<1x1x128xf32, #tpu.memory_space<vmem>>, vector<1x1x128xf32>,
    return
  }
  func.func @transform_0(%arg0: i32) -> (i32, i32, i32) {
    %c0_i32 = arith.constant 0 : i32
    %c0_i32_0 = arith.constant 0 : i32
    %c0_i32_1 = arith.constant 0 : i32
    return %arg0, %c0_i32, %c0_i32_0 : i32, i32, i32
  }
  func.func @transform_1(%arg0: i32) -> (i32, i32) {
    %c0_i32 = arith.constant 0 : i32
    %c0_i32_0 = arith.constant 0 : i32
    %c0_i32_1 = arith.constant 0 : i32
    return %c0_i32, %c0_i32_0 : i32, i32
  }
  func.func @transform_2(%arg0: i32) -> (i32, i32) {
    %c0_i32 = arith.constant 0 : i32
    %c0_i32_0 = arith.constant 0 : i32
    %c0_i32_1 = arith.constant 0 : i32
    return %c0_i32, %c0_i32_0 : i32, i32
  }
  func.func @transform_3(%arg0: i32) -> (i32, i32) {
    %c0_i32 = arith.constant 0 : i32
    %c0_i32_0 = arith.constant 0 : i32
    %c0_i32_1 = arith.constant 0 : i32
    return %c0_i32, %c0_i32_0 : i32, i32
  }
  func.func @transform_4(%arg0: i32) -> (i32, i32) {
    %c0_i32 = arith.constant 0 : i32
    %c0_i32_0 = arith.constant 0 : i32
    %c0_i32_1 = arith.constant 0 : i32
    return %c0_i32, %c0_i32_0 : i32, i32
  }
  func.func @transform_5(%arg0: i32) -> (i32, i32) {
    %c0_i32 = arith.constant 0 : i32
    %c0_i32_0 = arith.constant 0 : i32
    %c0_i32_1 = arith.constant 0 : i32
    return %c0_i32, %c0_i32_0 : i32, i32
  }
  func.func @transform_6(%arg0: i32) -> (i32, i32) {
    %c0_i32 = arith.constant 0 : i32
    %c0_i32_0 = arith.constant 0 : i32
    %c0_i32_1 = arith.constant 0 : i32
    return %c0_i32, %c0_i32_0 : i32, i32
  }
  func.func @transform_7(%arg0: i32) -> (i32, i32) {
    %c0_i32 = arith.constant 0 : i32
    %c0_i32_0 = arith.constant 0 : i32
    %c0_i32_1 = arith.constant 0 : i32
    return %c0_i32, %c0_i32_0 : i32, i32
  }
  func.func @transform_8(%arg0: i32) -> (i32, i32) {
    %c0_i32 = arith.constant 0 : i32
    %c0_i32_0 = arith.constant 0 : i32
    %c0_i32_1 = arith.constant 0 : i32
    return %c0_i32, %c0_i32_0 : i32, i32
  }
  func.func @transform_9(%arg0: i32) -> (i32, i32, i32) {
    %c0_i32 = arith.constant 0 : i32
    %c0_i32_0 = arith.constant 0 : i32
    %c0_i32_1 = arith.constant 0 : i32
    return %arg0, %c0_i32, %c0_i32_0 : i32, i32, i32
  }
}

</mosaic_0001>

<llo_original>
// kernel: cnn_baseline_forward.1
$region0: #{cnn_baseline_forward.1}
  #allocation0 [shape = 'u32[]', space=smem, size = 0x4, offset = 0x4, fixed_abs, tag = 'smem constant byte address 0x4 - core index']
  #allocation1 [shape = 'u32[144,128]{1,0:T(1,128)}', space=vmem, size = 0x12000, scoped, tag = 'internal scratch']
  #allocation2 [shape = 'f32[1,16,16,32]{3,2,1,0:T(8,128)}', space=vmem, size = 0x20000, scoped, tag = 'scratch operand']
  #allocation3 [shape = 'f32[1,10,10,32]{3,2,1,0:T(8,128)}', space=vmem, size = 0x14000, scoped, tag = 'scratch operand']
  #allocation4 [shape = 'f32[1,8,8,64]{3,2,1,0:T(8,128)}', space=vmem, size = 0x8000, scoped, tag = 'scratch operand']
  #allocation5 [shape = 'f32[1,6,10,64]{3,2,1,0:T(8,128)}', space=vmem, size = 0xc000, scoped, tag = 'scratch operand']
  %s0 = inlined_call_operand.vmem [shape: bf16[2,256,72], index: 0, kind: input, shape index: {}]
  %s1 = inlined_call_operand.vmem [shape: bf16[72,32], index: 1, kind: input, shape index: {}]
  %s2 = inlined_call_operand.vmem [shape: f32[1,32], index: 2, kind: input, shape index: {}]
  %s3 = inlined_call_operand.vmem [shape: bf16[288,64], index: 3, kind: input, shape index: {}]
  %s4 = inlined_call_operand.vmem [shape: f32[1,64], index: 4, kind: input, shape index: {}]
  %s5 = inlined_call_operand.vmem [shape: bf16[576,128], index: 5, kind: input, shape index: {}]
  %s6 = inlined_call_operand.vmem [shape: f32[1,128], index: 6, kind: input, shape index: {}]
  %s7 = inlined_call_operand.vmem [shape: bf16[128,128], index: 7, kind: input, shape index: {}]
  %s8 = inlined_call_operand.vmem [shape: f32[1,128], index: 8, kind: input, shape index: {}]
  %s9 = inlined_call_operand.hbm [shape: f32[2,1,128], index: 9, kind: output, shape index: {}]
  %s10 = sld [smem:[#allocation0]]
  $region69: #{cnn_baseline_forward.1} parent=0
    _
  %s12 = ssub.s32 1, %s10
  %s13 = scalar_select 0, %s12, %s10
  $region1: #{cnn_baseline_forward.1} parent=0
    #allocation6 [shape = 'u8[1024]{0}', space=vmem, size = 0x400, scoped, tag = 'output window, operand 0']
    #allocation7 [shape = 's32[2]{0}', space=sflag, size = 0x8, scoped, tag = 'scoped memory for cnn_baseline_forward.1']
    %14 = vsyncpa [#allocation7], 0
    %s15 = scalar_lea.sflag [#allocation7], 1
    %16 = vsyncpa %s15, 0
    loop: start=0, step=1, limit=4
    $region2: #{cnn_baseline_forward.1} parent=1 // loop_pre_header
      _
    $region3: #{cnn_baseline_forward.1} parent=1 // loop_header
      %s18 = sphi 0, %s22
      %p19 = scmp.ge.s32.totalorder %s18, 4
      %s28 = sphi 0, %s30
      %s31 = sphi 0, %s28
      %s32 = sphi 0, %s31
      %s48 = sphi 0, %s32
      %s52 = sphi 0, %s52
      %s54 = sphi 0, %s52
      %s55 = sphi 0, %s54
      %s69 = sphi 0, %s55
      %s73 = sphi 0, %s73
      %s75 = sphi 0, %s73
      %s76 = sphi 0, %s75
      %s90 = sphi 0, %s76
      %s94 = sphi 0, %s94
      %s96 = sphi 0, %s94
      %s97 = sphi 0, %s96
      %s111 = sphi 0, %s97
      %s115 = sphi 0, %s115
      %s117 = sphi 0, %s115
      %s118 = sphi 0, %s117
      %s132 = sphi 0, %s118
      %s136 = sphi 0, %s136
      %s138 = sphi 0, %s136
      %s139 = sphi 0, %s138
      %s153 = sphi 0, %s139
      %s157 = sphi 0, %s157
      %s159 = sphi 0, %s157
      %s160 = sphi 0, %s159
      %s174 = sphi 0, %s160
      %s178 = sphi 0, %s178
      %s180 = sphi 0, %s178
      %s181 = sphi 0, %s180
      %s195 = sphi 0, %s181
      %s199 = sphi 0, %s199
      %s201 = sphi 0, %s199
      %s202 = sphi 0, %s201
      %s216 = sphi 0, %s202
      %s222 = sphi 0, %s224
      %s225 = sphi 0, %s222
      %s226 = sphi 0, %s225
      %s242 = sphi 0, %s226
    $region4: #{cnn_baseline_forward.1} parent=1 // loop_header_branch
      %21 = sbr.rel (%p19) target = $region8
    $region5: #{cnn_baseline_forward.1} parent=1 // loop_body
      %s23 = ssub.s32 %s18, 1
      %s24 = ssub.s32 %s18, 2
      %s25 = sadd.s32 %s18, 1
      %s26 = ssub.s32 %s18, %s25
      %p27 = scmp.eq.s32.totalorder %s26, 0
      %s29 = sadd.s32 %s28, 1
      %s30 = scalar_select %p27, %s28, %s29
      %p33 = pneg %p27
      %p34 = scmp.eq.s32.totalorder %s18, 1
      %p35 = por %p33, %p34
      %p36 = scmp.ne.s32.totalorder %s28, %s31
      %p37 = scmp.eq.s32.totalorder %s18, 0
      %p38 = por %p36, %p37
      %p39 = scmp.ne.s32.totalorder %s28, %s31
      %p40 = scmp.eq.s32.totalorder %s23, 1
      %p41 = por %p39, %p40
      %p42 = scmp.ne.s32.totalorder %s31, %s32
      %p43 = scmp.eq.s32.totalorder %s23, 0
      %p44 = por %p42, %p43
      %p45 = scmp.ne.s32.totalorder %s31, %s32
      %p46 = scmp.eq.s32.totalorder %s24, 1
      %p47 = por %p45, %p46
      %p49 = scmp.ne.s32.totalorder %s32, %s48
      %p50 = scmp.eq.s32.totalorder %s24, 0
      %p51 = por %p49, %p50
      %s53 = sadd.s32 %s52, 1
      %p56 = scmp.eq.s32.totalorder %s18, 1
      %p57 = scmp.ne.s32.totalorder %s52, %s54
      %p58 = scmp.eq.s32.totalorder %s18, 0
      %p59 = por %p57, %p58
      %p60 = scmp.ne.s32.totalorder %s52, %s54
      %p61 = scmp.eq.s32.totalorder %s23, 1
      %p62 = por %p60, %p61
      %p63 = scmp.ne.s32.totalorder %s54, %s55
      %p64 = scmp.eq.s32.totalorder %s23, 0
      %p65 = por %p63, %p64
      %p66 = scmp.ne.s32.totalorder %s54, %s55
      %p67 = scmp.eq.s32.totalorder %s24, 1
      %p68 = por %p66, %p67
      %p70 = scmp.ne.s32.totalorder %s55, %s69
      %p71 = scmp.eq.s32.totalorder %s24, 0
      %p72 = por %p70, %p71
      %s74 = sadd.s32 %s73, 1
      %p77 = scmp.eq.s32.totalorder %s18, 1
      %p78 = scmp.ne.s32.totalorder %s73, %s75
      %p79 = scmp.eq.s32.totalorder %s18, 0
      %p80 = por %p78, %p79
      %p81 = scmp.ne.s32.totalorder %s73, %s75
      %p82 = scmp.eq.s32.totalorder %s23, 1
      %p83 = por %p81, %p82
      %p84 = scmp.ne.s32.totalorder %s75, %s76
      %p85 = scmp.eq.s32.totalorder %s23, 0
      %p86 = por %p84, %p85
      %p87 = scmp.ne.s32.totalorder %s75, %s76
      %p88 = scmp.eq.s32.totalorder %s24, 1
      %p89 = por %p87, %p88
      %p91 = scmp.ne.s32.totalorder %s76, %s90
      %p92 = scmp.eq.s32.totalorder %s24, 0
      %p93 = por %p91, %p92
      %s95 = sadd.s32 %s94, 1
      %p98 = scmp.eq.s32.totalorder %s18, 1
      %p99 = scmp.ne.s32.totalorder %s94, %s96
      %p100 = scmp.eq.s32.totalorder %s18, 0
      %p101 = por %p99, %p100
      %p102 = scmp.ne.s32.totalorder %s94, %s96
      %p103 = scmp.eq.s32.totalorder %s23, 1
      %p104 = por %p102, %p103
      %p105 = scmp.ne.s32.totalorder %s96, %s97
      %p106 = scmp.eq.s32.totalorder %s23, 0
      %p107 = por %p105, %p106
      %p108 = scmp.ne.s32.totalorder %s96, %s97
      %p109 = scmp.eq.s32.totalorder %s24, 1
      %p110 = por %p108, %p109
      %p112 = scmp.ne.s32.totalorder %s97, %s111
      %p113 = scmp.eq.s32.totalorder %s24, 0
      %p114 = por %p112, %p113
      %s116 = sadd.s32 %s115, 1
      %p119 = scmp.eq.s32.totalorder %s18, 1
      %p120 = scmp.ne.s32.totalorder %s115, %s117
      %p121 = scmp.eq.s32.totalorder %s18, 0
      %p122 = por %p120, %p121
      %p123 = scmp.ne.s32.totalorder %s115, %s117
      %p124 = scmp.eq.s32.totalorder %s23, 1
      %p125 = por %p123, %p124
      %p126 = scmp.ne.s32.totalorder %s117, %s118
      %p127 = scmp.eq.s32.totalorder %s23, 0
      %p128 = por %p126, %p127
      %p129 = scmp.ne.s32.totalorder %s117, %s118
      %p130 = scmp.eq.s32.totalorder %s24, 1
      %p131 = por %p129, %p130
      %p133 = scmp.ne.s32.totalorder %s118, %s132
      %p134 = scmp.eq.s32.totalorder %s24, 0
      %p135 = por %p133, %p134
      %s137 = sadd.s32 %s136, 1
      %p140 = scmp.eq.s32.totalorder %s18, 1
      %p141 = scmp.ne.s32.totalorder %s136, %s138
      %p142 = scmp.eq.s32.totalorder %s18, 0
      %p143 = por %p141, %p142
      %p144 = scmp.ne.s32.totalorder %s136, %s138
      %p145 = scmp.eq.s32.totalorder %s23, 1
      %p146 = por %p144, %p145
      %p147 = scmp.ne.s32.totalorder %s138, %s139
      %p148 = scmp.eq.s32.totalorder %s23, 0
      %p149 = por %p147, %p148
      %p150 = scmp.ne.s32.totalorder %s138, %s139
      %p151 = scmp.eq.s32.totalorder %s24, 1
      %p152 = por %p150, %p151
      %p154 = scmp.ne.s32.totalorder %s139, %s153
      %p155 = scmp.eq.s32.totalorder %s24, 0
      %p156 = por %p154, %p155
      %s158 = sadd.s32 %s157, 1
      %p161 = scmp.eq.s32.totalorder %s18, 1
      %p162 = scmp.ne.s32.totalorder %s157, %s159
      %p163 = scmp.eq.s32.totalorder %s18, 0
      %p164 = por %p162, %p163
      %p165 = scmp.ne.s32.totalorder %s157, %s159
      %p166 = scmp.eq.s32.totalorder %s23, 1
      %p167 = por %p165, %p166
      %p168 = scmp.ne.s32.totalorder %s159, %s160
      %p169 = scmp.eq.s32.totalorder %s23, 0
      %p170 = por %p168, %p169
      %p171 = scmp.ne.s32.totalorder %s159, %s160
      %p172 = scmp.eq.s32.totalorder %s24, 1
      %p173 = por %p171, %p172
      %p175 = scmp.ne.s32.totalorder %s160, %s174
      %p176 = scmp.eq.s32.totalorder %s24, 0
      %p177 = por %p175, %p176
      %s179 = sadd.s32 %s178, 1
      %p182 = scmp.eq.s32.totalorder %s18, 1
      %p183 = scmp.ne.s32.totalorder %s178, %s180
      %p184 = scmp.eq.s32.totalorder %s18, 0
      %p185 = por %p183, %p184
      %p186 = scmp.ne.s32.totalorder %s178, %s180
      %p187 = scmp.eq.s32.totalorder %s23, 1
      %p188 = por %p186, %p187
      %p189 = scmp.ne.s32.totalorder %s180, %s181
      %p190 = scmp.eq.s32.totalorder %s23, 0
      %p191 = por %p189, %p190
      %p192 = scmp.ne.s32.totalorder %s180, %s181
      %p193 = scmp.eq.s32.totalorder %s24, 1
      %p194 = por %p192, %p193
      %p196 = scmp.ne.s32.totalorder %s181, %s195
      %p197 = scmp.eq.s32.totalorder %s24, 0
      %p198 = por %p196, %p197
      %s200 = sadd.s32 %s199, 1
      %p203 = scmp.eq.s32.totalorder %s18, 1
      %p204 = scmp.ne.s32.totalorder %s199, %s201
      %p205 = scmp.eq.s32.totalorder %s18, 0
      %p206 = por %p204, %p205
      %p207 = scmp.ne.s32.totalorder %s199, %s201
      %p208 = scmp.eq.s32.totalorder %s23, 1
      %p209 = por %p207, %p208
      %p210 = scmp.ne.s32.totalorder %s201, %s202
      %p211 = scmp.eq.s32.totalorder %s23, 0
      %p212 = por %p210, %p211
      %p213 = scmp.ne.s32.totalorder %s201, %s202
      %p214 = scmp.eq.s32.totalorder %s24, 1
      %p215 = por %p213, %p214
      %p217 = scmp.ne.s32.totalorder %s202, %s216
      %p218 = scmp.eq.s32.totalorder %s24, 0
      %p219 = por %p217, %p218
      %s220 = ssub.s32 %s18, %s25
      %p221 = scmp.eq.s32.totalorder %s220, 0
      %s223 = sadd.s32 %s222, 1
      %s224 = scalar_select %p221, %s222, %s223
      %p227 = pneg %p221
      %p228 = scmp.eq.s32.totalorder %s18, 1
      %p229 = por %p227, %p228
      %p230 = scmp.ne.s32.totalorder %s222, %s225
      %p231 = scmp.eq.s32.totalorder %s18, 0
      %p232 = por %p230, %p231
      %p233 = scmp.ne.s32.totalorder %s222, %s225
      %p234 = scmp.eq.s32.totalorder %s23, 1
      %p235 = por %p233, %p234
      %p236 = scmp.ne.s32.totalorder %s225, %s226
      %p237 = scmp.eq.s32.totalorder %s23, 0
      %p238 = por %p236, %p237
      %p239 = scmp.ne.s32.totalorder %s225, %s226
      %p240 = scmp.eq.s32.totalorder %s24, 1
      %p241 = por %p239, %p240
      %p243 = scmp.ne.s32.totalorder %s226, %s242
      %p244 = scmp.eq.s32.totalorder %s24, 0
      %p245 = por %p243, %p244
      %p246 = scmp.le.s32.totalorder 1, %s18
      %p247 = scmp.lt.s32.totalorder %s18, 3
      %p248 = pnand %p246, %p247
      %p249 = pneg %p248
      // Predicated region
      $region9: #{cnn_baseline_forward.1} parent=5 // pred_check
        _
      $region10: #{cnn_baseline_forward.1} parent=5 // pred_check_branch
        %251 = sbr.rel (%p248) target = $region12
      $region11: #{cnn_baseline_forward.1} parent=5 // pred_region
        %s252 = ssub.s32 %s18, 1
        // Predicated region
        $region13: #{cnn_baseline_forward.1} parent=11 // pred_check
          %p253 = pneg %p65
        $region14: #{cnn_baseline_forward.1} parent=11 // pred_check_branch
          %255 = sbr.rel (%p253) target = $region16
        $region15: #{cnn_baseline_forward.1} parent=11 // pred_region
          _
        $region16: #{cnn_baseline_forward.1} parent=11 // pred_fallthru
          _
        // Predicated region
        $region17: #{cnn_baseline_forward.1} parent=11 // pred_check
          %p256 = pneg %p86
        $region18: #{cnn_baseline_forward.1} parent=11 // pred_check_branch
          %258 = sbr.rel (%p256) target = $region20
        $region19: #{cnn_baseline_forward.1} parent=11 // pred_region
          _
        $region20: #{cnn_baseline_forward.1} parent=11 // pred_fallthru
          _
        // Predicated region
        $region21: #{cnn_baseline_forward.1} parent=11 // pred_check
          %p259 = pneg %p107
        $region22: #{cnn_baseline_forward.1} parent=11 // pred_check_branch
          %261 = sbr.rel (%p259) target = $region24
        $region23: #{cnn_baseline_forward.1} parent=11 // pred_region
          _
        $region24: #{cnn_baseline_forward.1} parent=11 // pred_fallthru
          _
        // Predicated region
        $region25: #{cnn_baseline_forward.1} parent=11 // pred_check
          %p262 = pneg %p128
        $region26: #{cnn_baseline_forward.1} parent=11 // pred_check_branch
          %264 = sbr.rel (%p262) target = $region28
        $region27: #{cnn_baseline_forward.1} parent=11 // pred_region
          _
        $region28: #{cnn_baseline_forward.1} parent=11 // pred_fallthru
          _
        // Predicated region
        $region29: #{cnn_baseline_forward.1} parent=11 // pred_check
          %p265 = pneg %p149
        $region30: #{cnn_baseline_forward.1} parent=11 // pred_check_branch
          %267 = sbr.rel (%p265) target = $region32
        $region31: #{cnn_baseline_forward.1} parent=11 // pred_region
          _
        $region32: #{cnn_baseline_forward.1} parent=11 // pred_fallthru
          _
        // Predicated region
        $region33: #{cnn_baseline_forward.1} parent=11 // pred_check
          %p268 = pneg %p170
        $region34: #{cnn_baseline_forward.1} parent=11 // pred_check_branch
          %270 = sbr.rel (%p268) target = $region36
        $region35: #{cnn_baseline_forward.1} parent=11 // pred_region
          _
        $region36: #{cnn_baseline_forward.1} parent=11 // pred_fallthru
          _
        // Predicated region
        $region37: #{cnn_baseline_forward.1} parent=11 // pred_check
          %p271 = pneg %p191
        $region38: #{cnn_baseline_forward.1} parent=11 // pred_check_branch
          %273 = sbr.rel (%p271) target = $region40
        $region39: #{cnn_baseline_forward.1} parent=11 // pred_region
          _
        $region40: #{cnn_baseline_forward.1} parent=11 // pred_fallthru
          _
        // Predicated region
        $region41: #{cnn_baseline_forward.1} parent=11 // pred_check
          %p274 = pneg %p212
        $region42: #{cnn_baseline_forward.1} parent=11 // pred_check_branch
          %276 = sbr.rel (%p274) target = $region44
        $region43: #{cnn_baseline_forward.1} parent=11 // pred_region
          _
        $region44: #{cnn_baseline_forward.1} parent=11 // pred_fallthru
          _
      $region12: #{cnn_baseline_forward.1} parent=5 // pred_fallthru
        _
      %p277 = scmp.lt.s32.totalorder %s18, 2
      // Predicated region
      $region45: #{cnn_baseline_forward.1} parent=5 // pred_check
        %p278 = pneg %p277
      $region46: #{cnn_baseline_forward.1} parent=5 // pred_check_branch
        %280 = sbr.rel (%p278) target = $region48
      $region47: #{cnn_baseline_forward.1} parent=5 // pred_region
        // Predicated region
        $region49: #{cnn_baseline_forward.1} parent=47 // pred_check
          %p281 = pneg %p38
        $region50: #{cnn_baseline_forward.1} parent=47 // pred_check_branch
          %283 = sbr.rel (%p281) target = $region52
        $region51: #{cnn_baseline_forward.1} parent=47 // pred_region
          %p284 = scmp.lt.s32.totalorder %s18, 1
          %s285 = scalar_select %p284, %s18, 1
          %s286 = smul.addr %s285, 32
          %s287 = smul.addr %s286, 4
          %s288 = scalar_lea.vmem %s0, %s287
        $region52: #{cnn_baseline_forward.1} parent=47 // pred_fallthru
          _
      $region48: #{cnn_baseline_forward.1} parent=5 // pred_fallthru
        _
      %p289 = scmp.le.s32.totalorder 1, %s18
      %p290 = scmp.lt.s32.totalorder %s18, 3
      %p291 = pnand %p289, %p290
      %p292 = pneg %p291
      // Predicated region
      $region53: #{cnn_baseline_forward.1} parent=5 // pred_check
        _
      $region54: #{cnn_baseline_forward.1} parent=5 // pred_check_branch
        %294 = sbr.rel (%p291) target = $region56
      $region55: #{cnn_baseline_forward.1} parent=5 // pred_region
        %s295 = ssub.s32 %s18, 1
        %p296 = scmp.lt.s32.totalorder %s23, 1
        %s297 = scalar_select %p296, %s23, 1
        %s298 = smul.addr %s297, 32
        %s299 = smul.addr %s298, 4
        %s300 = scalar_lea.vmem %s0, %s299
        %p301 = pneg %p44
        %p302 = pneg %p41
        %p303 = pneg %p65
        %p304 = pneg %p62
        %p305 = pneg %p86
        %p306 = pneg %p83
        %p307 = pneg %p107
        %p308 = pneg %p104
        %p309 = pneg %p128
        %p310 = pneg %p125
        %p311 = pneg %p149
        %p312 = pneg %p146
        %p313 = pneg %p170
        %p314 = pneg %p167
        %p315 = pneg %p191
        %p316 = pneg %p188
        %p317 = pneg %p212
        %p318 = pneg %p209
        %p319 = pneg %p238
        %p320 = pneg %p235
        %s321 = sand.u32 %s225, 1
        %s322 = scalar_lea.sflag [#allocation7], %s321
        %s323 = sand.u32 %s225, 1
        %s324 = scalar_lea.vmem [#allocation6], %s323
        %p325 = scmp.lt.s32.totalorder %s23, 1
        %s326 = scalar_select %p325, %s23, 1
        %s327 = smul.addr %s326, 32
        %s328 = smul.addr %s327, 4
        %s329 = scalar_lea.vmem %s0, %s328
        %v331 = vld [vmem:[%s329] sm:$0xf]
        %v332 = vld [vmem:[%s329 + $0x4] sm:$0xf]
        %v333 = vld [vmem:[%s329 + $0x8] sm:$0xf]
        %v334 = vld [vmem:[%s329 + $0xc] sm:$0xf]
        %v335 = vld [vmem:[%s329 + $0x10] sm:$0xf]
        %v336 = vld [vmem:[%s329 + $0x14] sm:$0xf]
        %v337 = vld [vmem:[%s329 + $0x18] sm:$0xf]
        %v338 = vld [vmem:[%s329 + $0x1c] sm:$0xf]
        %v339 = vld [vmem:[%s329 + $0x20] sm:$0xf]
        %v340 = vld [vmem:[%s329 + $0x24] sm:$0xf]
        %v341 = vld [vmem:[%s329 + $0x28] sm:$0xf]
        %v342 = vld [vmem:[%s329 + $0x2c] sm:$0xf]
        %v343 = vld [vmem:[%s329 + $0x30] sm:$0xf]
        %v344 = vld [vmem:[%s329 + $0x34] sm:$0xf]
        %v345 = vld [vmem:[%s329 + $0x38] sm:$0xf]
        %v346 = vld [vmem:[%s329 + $0x3c] sm:$0xf]
        %v347 = vld [vmem:[%s329 + $0x40] sm:$0xf]
        %v348 = vld [vmem:[%s329 + $0x44] sm:$0xf]
        %v349 = vld [vmem:[%s329 + $0x48] sm:$0xf]
        %v350 = vld [vmem:[%s329 + $0x4c] sm:$0xf]
        %v351 = vld [vmem:[%s329 + $0x50] sm:$0xf]
        %v352 = vld [vmem:[%s329 + $0x54] sm:$0xf]
        %v353 = vld [vmem:[%s329 + $0x58] sm:$0xf]
        %v354 = vld [vmem:[%s329 + $0x5c] sm:$0xf]
        %v355 = vld [vmem:[%s329 + $0x60] sm:$0xf]
        %v356 = vld [vmem:[%s329 + $0x64] sm:$0xf]
        %v357 = vld [vmem:[%s329 + $0x68] sm:$0xf]
        %v358 = vld [vmem:[%s329 + $0x6c] sm:$0xf]
        %v359 = vld [vmem:[%s329 + $0x70] sm:$0xf]
        %v360 = vld [vmem:[%s329 + $0x74] sm:$0xf]
        %v361 = vld [vmem:[%s329 + $0x78] sm:$0xf]
        %v362 = vld [vmem:[%s329 + $0x7c] sm:$0xf]
        %v363 = vld [vmem:[%s1] sm:$0xf]
        %v364 = vld [vmem:[%s1 + $0x4] sm:$0xf]
        %v365 = vld [vmem:[%s1 + $0x8] sm:$0xf]
        %v366 = vld [vmem:[%s1 + $0xc] sm:$0xf]
        %v367 = vld [vmem:[%s1 + $0x10] sm:$0xf]
        %v368 = vld [vmem:[%s1 + $0x14] sm:$0xf]
        %v369 = vld [vmem:[%s1 + $0x18] sm:$0xf]
        %v370 = vld [vmem:[%s1 + $0x1c] sm:$0xf]
        %v371 = vld [vmem:[%s1 + $0x20] sm:$0xf]
        %v372 = vld [vmem:[%s2] sm:$0x1]
        %v374 = vlaneseq
        %v375 = vshrl.u32 %v374, 7
        %v376 = vsub.s32 0, %v375
        %v377 = vrot.slane %v372, %v376
        %v411 = vunpack.c.l.b16 %v331
        %v412 = vunpack.c.l.b16 %v332
        %v413 = vunpack.c.l.b16 %v333
        %v414 = vunpack.c.l.b16 %v334
        %v415 = vunpack.c.l.b16 %v335
        %v416 = vunpack.c.l.b16 %v336
        %v417 = vunpack.c.l.b16 %v337
        %v418 = vunpack.c.l.b16 %v338
        %v419 = vunpack.c.l.b16 %v339
        %v420 = vunpack.c.l.b16 %v340
        %v421 = vunpack.c.l.b16 %v341
        %v422 = vunpack.c.l.b16 %v342
        %v423 = vunpack.c.l.b16 %v343
        %v424 = vunpack.c.l.b16 %v344
        %v425 = vunpack.c.l.b16 %v345
        %v426 = vunpack.c.l.b16 %v346
        %v427 = vunpack.c.l.b16 %v347
        %v428 = vunpack.c.l.b16 %v348
        %v429 = vunpack.c.l.b16 %v349
        %v430 = vunpack.c.l.b16 %v350
        %v431 = vunpack.c.l.b16 %v351
        %v432 = vunpack.c.l.b16 %v352
        %v433 = vunpack.c.l.b16 %v353
        %v434 = vunpack.c.l.b16 %v354
        %v435 = vunpack.c.l.b16 %v355
        %v436 = vunpack.c.l.b16 %v356
        %v437 = vunpack.c.l.b16 %v357
        %v438 = vunpack.c.l.b16 %v358
        %v439 = vunpack.c.l.b16 %v359
        %v440 = vunpack.c.l.b16 %v360
        %v441 = vunpack.c.l.b16 %v361
        %v442 = vunpack.c.l.b16 %v362
        %v443 = vpack.c.b16 %v412, %v411
        %v444 = vpack.c.b16 %v414, %v413
        %v445 = vpack.c.b16 %v416, %v415
        %v446 = vpack.c.b16 %v418, %v417
        %v447 = vpack.c.b16 %v420, %v419
        %v448 = vpack.c.b16 %v422, %v421
        %v449 = vpack.c.b16 %v424, %v423
        %v450 = vpack.c.b16 %v426, %v425
        %v451 = vpack.c.b16 %v428, %v427
        %v452 = vpack.c.b16 %v430, %v429
        %v453 = vpack.c.b16 %v432, %v431
        %v454 = vpack.c.b16 %v434, %v433
        %v455 = vpack.c.b16 %v436, %v435
        %v456 = vpack.c.b16 %v438, %v437
        %v457 = vpack.c.b16 %v440, %v439
        %v458 = vpack.c.b16 %v442, %v441
        %v468 = vunpack.c.l.b16 %v363
        %v469 = vunpack.c.l.b16 %v364
        %v470 = vunpack.c.l.b16 %v365
        %v471 = vunpack.c.l.b16 %v366
        %v472 = vunpack.c.l.b16 %v367
        %v473 = vunpack.c.l.b16 %v368
        %v474 = vunpack.c.l.b16 %v369
        %v475 = vunpack.c.l.b16 %v370
        %v476 = vunpack.c.l.b16 %v371
        %v477 = vpack.c.b16 %v469, %v468
        %v478 = vpack.c.b16 %v471, %v470
        %v479 = vpack.c.b16 %v473, %v472
        %v480 = vpack.c.b16 %v475, %v474
        %v481 = vpack.c.b16 %v476, %v476
        %vm486 = vcmask 588800
        %v488 = vsel %vm486, %v443, 0
        %v491 = vsel %vm486, %v444, 0
        %v494 = vsel %vm486, %v445, 0
        %v497 = vsel %vm486, %v446, 0
        %v500 = vsel %vm486, %v447, 0
        %v503 = vsel %vm486, %v448, 0
        %v506 = vsel %vm486, %v449, 0
        %v509 = vsel %vm486, %v450, 0
        %v512 = vsel %vm486, %v451, 0
        %v515 = vsel %vm486, %v452, 0
        %v518 = vsel %vm486, %v453, 0
        %v521 = vsel %vm486, %v454, 0
        %v524 = vsel %vm486, %v455, 0
        %v527 = vsel %vm486, %v456, 0
        %v530 = vsel %vm486, %v457, 0
        %v533 = vsel %vm486, %v458, 0
        %vm535 = vcmask 1043456
        %v537 = vsel %vm535, %v481, 0
        %539 = vmatprep.subr.bf16.mxu0 0
        %540 = vmatpush1.bf16.msra.mxu0 %v477
        %541 = vmatprep.subr.bf16.mxu0 0
        %542 = vmatpush1.bf16.msra.mxu0 %v478
        %543 = vmatprep.subr.bf16.mxu0 0
        %544 = vmatpush1.bf16.msra.mxu0 %v479
        %545 = vmatprep.subr.bf16.mxu0 0
        %546 = vmatpush1.bf16.msra.mxu0 %v480
        %547 = vmatprep.subr.bf16.mxu0 0
        %548 = vmatpush1.bf16.msra.mxu0 %v537
        %549 = vmatprep.subr.bf16.mxu0 0
        %550 = vmatpush1.bf16.msra.mxu0 0
        %551 = vmatprep.subr.bf16.mxu0 0
        %552 = vmatpush1.bf16.msra.mxu0 0
        %553 = vmatprep.subr.bf16.mxu0 0
        %554 = vmatpush1.bf16.msra.mxu0 0
        %555 = vmatprep.subr.bf16.mxu0 0
        %556 = vmatpush1.bf16.msra.mxu0 0
        %557 = vmatprep.subr.bf16.mxu0 0
        %558 = vmatpush1.bf16.msra.mxu0 0
        %559 = vmatprep.subr.bf16.mxu0 0
        %560 = vmatpush1.bf16.msra.mxu0 0
        %561 = vmatprep.subr.bf16.mxu0 0
        %562 = vmatpush1.bf16.msra.mxu0 0
        %563 = vmatprep.subr.bf16.mxu0 0
        %564 = vmatpush1.bf16.msra.mxu0 0
        %565 = vmatprep.subr.bf16.mxu0 0
        %566 = vmatpush1.bf16.msra.mxu0 0
        %567 = vmatprep.subr.bf16.mxu0 0
        %568 = vmatpush1.bf16.msra.mxu0 0
        %569 = vmatprep.subr.bf16.mxu0 0
        %570 = vmatpush1.bf16.msra.mxu0 0
        %571 = vmatprep.mubr.bf16.mxu0 0
        %572 = vmatmul.mubr.bf16.gmra.mrb[0].mxu0 %v488
        %v573 = vpop.f32.mrb[0].mxu0
        %v574 = vadd.f32 %v377, %v573
        %v575 = vpop.f32.mrb[0].mxu0
        %v576 = vpop.f32.mrb[0].mxu0
        %v577 = vadd.f32 %v377, %v576
        %v578 = vpop.f32.mrb[0].mxu0
        %579 = vmatprep.mubr.bf16.mxu0 0
        %580 = vmatmul.mubr.bf16.gmra.mrb[0].mxu0 %v491
        %v581 = vpop.f32.mrb[0].mxu0
        %v582 = vadd.f32 %v377, %v581
        %v583 = vpop.f32.mrb[0].mxu0
        %v584 = vpop.f32.mrb[0].mxu0
        %v585 = vadd.f32 %v377, %v584
        %v586 = vpop.f32.mrb[0].mxu0
        %587 = vmatprep.mubr.bf16.mxu0 0
        %588 = vmatmul.mubr.bf16.gmra.mrb[0].mxu0 %v494
        %v589 = vpop.f32.mrb[0].mxu0
        %v590 = vadd.f32 %v377, %v589
        %v591 = vpop.f32.mrb[0].mxu0
        %v592 = vpop.f32.mrb[0].mxu0
        %v593 = vadd.f32 %v377, %v592
        %v594 = vpop.f32.mrb[0].mxu0
        %595 = vmatprep.mubr.bf16.mxu0 0
        %596 = vmatmul.mubr.bf16.gmra.mrb[0].mxu0 %v497
        %v597 = vpop.f32.mrb[0].mxu0
        %v598 = vadd.f32 %v377, %v597
        %v599 = vpop.f32.mrb[0].mxu0
        %v600 = vpop.f32.mrb[0].mxu0
        %v601 = vadd.f32 %v377, %v600
        %v602 = vpop.f32.mrb[0].mxu0
        %603 = vmatprep.mubr.bf16.mxu0 0
        %604 = vmatmul.mubr.bf16.gmra.mrb[0].mxu0 %v500
        %v605 = vpop.f32.mrb[0].mxu0
        %v606 = vadd.f32 %v377, %v605
        %v607 = vpop.f32.mrb[0].mxu0
        %v608 = vpop.f32.mrb[0].mxu0
        %v609 = vadd.f32 %v377, %v608
        %v610 = vpop.f32.mrb[0].mxu0
        %611 = vmatprep.mubr.bf16.mxu0 0
        %612 = vmatmul.mubr.bf16.gmra.mrb[0].mxu0 %v503
        %v613 = vpop.f32.mrb[0].mxu0
        %v614 = vadd.f32 %v377, %v613
        %v615 = vpop.f32.mrb[0].mxu0
        %v616 = vpop.f32.mrb[0].mxu0
        %v617 = vadd.f32 %v377, %v616
        %v618 = vpop.f32.mrb[0].mxu0
        %619 = vmatprep.mubr.bf16.mxu0 0
        %620 = vmatmul.mubr.bf16.gmra.mrb[0].mxu0 %v506
        %v621 = vpop.f32.mrb[0].mxu0
        %v622 = vadd.f32 %v377, %v621
        %v623 = vpop.f32.mrb[0].mxu0
        %v624 = vpop.f32.mrb[0].mxu0
        %v625 = vadd.f32 %v377, %v624
        %v626 = vpop.f32.mrb[0].mxu0
        %627 = vmatprep.mubr.bf16.mxu0 0
        %628 = vmatmul.mubr.bf16.gmra.mrb[0].mxu0 %v509
        %v629 = vpop.f32.mrb[0].mxu0
        %v630 = vadd.f32 %v377, %v629
        %v631 = vpop.f32.mrb[0].mxu0
        %v632 = vpop.f32.mrb[0].mxu0
        %v633 = vadd.f32 %v377, %v632
        %v634 = vpop.f32.mrb[0].mxu0
        %635 = vmatprep.mubr.bf16.mxu0 0
        %636 = vmatmul.mubr.bf16.gmra.mrb[0].mxu0 %v512
        %v637 = vpop.f32.mrb[0].mxu0
        %v638 = vadd.f32 %v377, %v637
        %v639 = vpop.f32.mrb[0].mxu0
        %v640 = vpop.f32.mrb[0].mxu0
        %v641 = vadd.f32 %v377, %v640
        %v642 = vpop.f32.mrb[0].mxu0
        %643 = vmatprep.mubr.bf16.mxu0 0
        %644 = vmatmul.mubr.bf16.gmra.mrb[0].mxu0 %v515
        %v645 = vpop.f32.mrb[0].mxu0
        %v646 = vadd.f32 %v377, %v645
        %v647 = vpop.f32.mrb[0].mxu0
        %v648 = vpop.f32.mrb[0].mxu0
        %v649 = vadd.f32 %v377, %v648
        %v650 = vpop.f32.mrb[0].mxu0
        %651 = vmatprep.mubr.bf16.mxu0 0
        %652 = vmatmul.mubr.bf16.gmra.mrb[0].mxu0 %v518
        %v653 = vpop.f32.mrb[0].mxu0
        %v654 = vadd.f32 %v377, %v653
        %v655 = vpop.f32.mrb[0].mxu0
        %v656 = vpop.f32.mrb[0].mxu0
        %v657 = vadd.f32 %v377, %v656
        %v658 = vpop.f32.mrb[0].mxu0
        %659 = vmatprep.mubr.bf16.mxu0 0
        %660 = vmatmul.mubr.bf16.gmra.mrb[0].mxu0 %v521
        %v661 = vpop.f32.mrb[0].mxu0
        %v662 = vadd.f32 %v377, %v661
        %v663 = vpop.f32.mrb[0].mxu0
        %v664 = vpop.f32.mrb[0].mxu0
        %v665 = vadd.f32 %v377, %v664
        %v666 = vpop.f32.mrb[0].mxu0
        %667 = vmatprep.mubr.bf16.mxu0 0
        %668 = vmatmul.mubr.bf16.gmra.mrb[0].mxu0 %v524
        %v669 = vpop.f32.mrb[0].mxu0
        %v670 = vadd.f32 %v377, %v669
        %v671 = vpop.f32.mrb[0].mxu0
        %v672 = vpop.f32.mrb[0].mxu0
        %v673 = vadd.f32 %v377, %v672
        %v674 = vpop.f32.mrb[0].mxu0
        %675 = vmatprep.mubr.bf16.mxu0 0
        %676 = vmatmul.mubr.bf16.gmra.mrb[0].mxu0 %v527
        %v677 = vpop.f32.mrb[0].mxu0
        %v678 = vadd.f32 %v377, %v677
        %v679 = vpop.f32.mrb[0].mxu0
        %v680 = vpop.f32.mrb[0].mxu0
        %v681 = vadd.f32 %v377, %v680
        %v682 = vpop.f32.mrb[0].mxu0
        %683 = vmatprep.mubr.bf16.mxu0 0
        %684 = vmatmul.mubr.bf16.gmra.mrb[0].mxu0 %v530
        %v685 = vpop.f32.mrb[0].mxu0
        %v686 = vadd.f32 %v377, %v685
        %v687 = vpop.f32.mrb[0].mxu0
        %v688 = vpop.f32.mrb[0].mxu0
        %v689 = vadd.f32 %v377, %v688
        %v690 = vpop.f32.mrb[0].mxu0
        %691 = vmatprep.mubr.bf16.mxu0 0
        %692 = vmatmul.mubr.bf16.gmra.mrb[0].mxu0 %v533
        %v693 = vpop.f32.mrb[0].mxu0
        %v694 = vadd.f32 %v377, %v693
        %v695 = vpop.f32.mrb[0].mxu0
        %v696 = vpop.f32.mrb[0].mxu0
        %v697 = vadd.f32 %v377, %v696
        %v698 = vpop.f32.mrb[0].mxu0
        %699 = vdwg.mxu0
        %v700 = vmax.f32 %v574, 0.0
        %v701 = vmax.f32 %v577, 0.0
        %v702 = vmax.f32 %v582, 0.0
        %v703 = vmax.f32 %v585, 0.0
        %v704 = vmax.f32 %v590, 0.0
        %v705 = vmax.f32 %v593, 0.0
        %v706 = vmax.f32 %v598, 0.0
        %v707 = vmax.f32 %v601, 0.0
        %v708 = vmax.f32 %v606, 0.0
        %v709 = vmax.f32 %v609, 0.0
        %v710 = vmax.f32 %v614, 0.0
        %v711 = vmax.f32 %v617, 0.0
        %v712 = vmax.f32 %v622, 0.0
        %v713 = vmax.f32 %v625, 0.0
        %v714 = vmax.f32 %v630, 0.0
        %v715 = vmax.f32 %v633, 0.0
        %v716 = vmax.f32 %v638, 0.0
        %v717 = vmax.f32 %v641, 0.0
        %v718 = vmax.f32 %v646, 0.0
        %v719 = vmax.f32 %v649, 0.0
        %v720 = vmax.f32 %v654, 0.0
        %v721 = vmax.f32 %v657, 0.0
        %v722 = vmax.f32 %v662, 0.0
        %v723 = vmax.f32 %v665, 0.0
        %v724 = vmax.f32 %v670, 0.0
        %v725 = vmax.f32 %v673, 0.0
        %v726 = vmax.f32 %v678, 0.0
        %v727 = vmax.f32 %v681, 0.0
        %v728 = vmax.f32 %v686, 0.0
        %v729 = vmax.f32 %v689, 0.0
        %v730 = vmax.f32 %v694, 0.0
        %v731 = vmax.f32 %v697, 0.0
        %vm732 = vcmask 261120
        %733 = vst.msk [vmem:[#allocation2] sm:$0xff] %vm732, %v700
        %734 = vst.msk [vmem:[#allocation2 + $0x8] sm:$0xff] %vm732, %v701
        %735 = vst.msk [vmem:[#allocation2 + $0x10] sm:$0xff] %vm732, %v702
        %736 = vst.msk [vmem:[#allocation2 + $0x18] sm:$0xff] %vm732, %v703
        %737 = vst.msk [vmem:[#allocation2 + $0x20] sm:$0xff] %vm732, %v704
        %738 = vst.msk [vmem:[#allocation2 + $0x28] sm:$0xff] %vm732, %v705
        %739 = vst.msk [vmem:[#allocation2 + $0x30] sm:$0xff] %vm732, %v706
        %740 = vst.msk [vmem:[#allocation2 + $0x38] sm:$0xff] %vm732, %v707
        %741 = vst.msk [vmem:[#allocation2 + $0x40] sm:$0xff] %vm732, %v708
        %742 = vst.msk [vmem:[#allocation2 + $0x48] sm:$0xff] %vm732, %v709
        %743 = vst.msk [vmem:[#allocation2 + $0x50] sm:$0xff] %vm732, %v710
        %744 = vst.msk [vmem:[#allocation2 + $0x58] sm:$0xff] %vm732, %v711
        %745 = vst.msk [vmem:[#allocation2 + $0x60] sm:$0xff] %vm732, %v712
        %746 = vst.msk [vmem:[#allocation2 + $0x68] sm:$0xff] %vm732, %v713
        %747 = vst.msk [vmem:[#allocation2 + $0x70] sm:$0xff] %vm732, %v714
        %748 = vst.msk [vmem:[#allocation2 + $0x78] sm:$0xff] %vm732, %v715
        %749 = vst.msk [vmem:[#allocation2 + $0x80] sm:$0xff] %vm732, %v716
        %750 = vst.msk [vmem:[#allocation2 + $0x88] sm:$0xff] %vm732, %v717
        %751 = vst.msk [vmem:[#allocation2 + $0x90] sm:$0xff] %vm732, %v718
        %752 = vst.msk [vmem:[#allocation2 + $0x98] sm:$0xff] %vm732, %v719
        %753 = vst.msk [vmem:[#allocation2 + $0xa0] sm:$0xff] %vm732, %v720
        %754 = vst.msk [vmem:[#allocation2 + $0xa8] sm:$0xff] %vm732, %v721
        %755 = vst.msk [vmem:[#allocation2 + $0xb0] sm:$0xff] %vm732, %v722
        %756 = vst.msk [vmem:[#allocation2 + $0xb8] sm:$0xff] %vm732, %v723
        %757 = vst.msk [vmem:[#allocation2 + $0xc0] sm:$0xff] %vm732, %v724
        %758 = vst.msk [vmem:[#allocation2 + $0xc8] sm:$0xff] %vm732, %v725
        %759 = vst.msk [vmem:[#allocation2 + $0xd0] sm:$0xff] %vm732, %v726
        %760 = vst.msk [vmem:[#allocation2 + $0xd8] sm:$0xff] %vm732, %v727
        %761 = vst.msk [vmem:[#allocation2 + $0xe0] sm:$0xff] %vm732, %v728
        %762 = vst.msk [vmem:[#allocation2 + $0xe8] sm:$0xff] %vm732, %v729
        %763 = vst.msk [vmem:[#allocation2 + $0xf0] sm:$0xff] %vm732, %v730
        %764 = vst.msk [vmem:[#allocation2 + $0xf8] sm:$0xff] %vm732, %v731
        %v765 = vld [vmem:[#allocation2] ss:$2 sm:$0xff]
        %s766 = scalar_lea.vmem [#allocation2], 32
        %v767 = vld [vmem:[%s766] ss:$2 sm:$0xff]
        %s768 = scalar_lea.vmem [#allocation2], 64
        %v769 = vld [vmem:[%s768] ss:$2 sm:$0xff]
        %s770 = scalar_lea.vmem [#allocation2], 96
        %v771 = vld [vmem:[%s770] ss:$2 sm:$0xff]
        %s772 = scalar_lea.vmem [#allocation2], 128
        %v773 = vld [vmem:[%s772] ss:$2 sm:$0xff]
        %s774 = scalar_lea.vmem [#allocation2], 160
        %v775 = vld [vmem:[%s774] ss:$2 sm:$0xff]
        %s776 = scalar_lea.vmem [#allocation2], 192
        %v777 = vld [vmem:[%s776] ss:$2 sm:$0xff]
        %s778 = scalar_lea.vmem [#allocation2], 224
        %v779 = vld [vmem:[%s778] ss:$2 sm:$0xff]
        %s780 = scalar_lea.vmem [#allocation2], 1
        %v781 = vld [vmem:[%s780] ss:$2 sm:$0xff]
        %s782 = scalar_lea.vmem [#allocation2], 33
        %v783 = vld [vmem:[%s782] ss:$2 sm:$0xff]
        %s784 = scalar_lea.vmem [#allocation2], 65
        %v785 = vld [vmem:[%s784] ss:$2 sm:$0xff]
        %s786 = scalar_lea.vmem [#allocation2], 97
        %v787 = vld [vmem:[%s786] ss:$2 sm:$0xff]
        %s788 = scalar_lea.vmem [#allocation2], 129
        %v789 = vld [vmem:[%s788] ss:$2 sm:$0xff]
        %s790 = scalar_lea.vmem [#allocation2], 161
        %v791 = vld [vmem:[%s790] ss:$2 sm:$0xff]
        %s792 = scalar_lea.vmem [#allocation2], 193
        %v793 = vld [vmem:[%s792] ss:$2 sm:$0xff]
        %s794 = scalar_lea.vmem [#allocation2], 225
        %v795 = vld [vmem:[%s794] ss:$2 sm:$0xff]
        %v796 = vmax.f32 %v765, %v781
        %v797 = vmax.f32 %v767, %v783
        %v798 = vmax.f32 %v769, %v785
        %v799 = vmax.f32 %v771, %v787
        %v800 = vmax.f32 %v773, %v789
        %v801 = vmax.f32 %v775, %v791
        %v802 = vmax.f32 %v777, %v793
        %v803 = vmax.f32 %v779, %v795
        %s804 = scalar_lea.vmem [#allocation2], 16
        %v805 = vld [vmem:[%s804] ss:$2 sm:$0xff]
        %s806 = scalar_lea.vmem %s804, 32 [#allocation2]
        %v807 = vld [vmem:[%s806] ss:$2 sm:$0xff]
        %s808 = scalar_lea.vmem %s804, 64 [#allocation2]
        %v809 = vld [vmem:[%s808] ss:$2 sm:$0xff]
        %s810 = scalar_lea.vmem %s804, 96 [#allocation2]
        %v811 = vld [vmem:[%s810] ss:$2 sm:$0xff]
        %s812 = scalar_lea.vmem %s804, 128 [#allocation2]
        %v813 = vld [vmem:[%s812] ss:$2 sm:$0xff]
        %s814 = scalar_lea.vmem %s804, 160 [#allocation2]
        %v815 = vld [vmem:[%s814] ss:$2 sm:$0xff]
        %s816 = scalar_lea.vmem %s804, 192 [#allocation2]
        %v817 = vld [vmem:[%s816] ss:$2 sm:$0xff]
        %s818 = scalar_lea.vmem %s804, 224 [#allocation2]
        %v819 = vld [vmem:[%s818] ss:$2 sm:$0xff]
        %s820 = scalar_lea.vmem %s804, 1 [#allocation2]
        %v821 = vld [vmem:[%s820] ss:$2 sm:$0xff]
        %s822 = scalar_lea.vmem %s804, 33 [#allocation2]
        %v823 = vld [vmem:[%s822] ss:$2 sm:$0xff]
        %s824 = scalar_lea.vmem %s804, 65 [#allocation2]
        %v825 = vld [vmem:[%s824] ss:$2 sm:$0xff]
        %s826 = scalar_lea.vmem %s804, 97 [#allocation2]
        %v827 = vld [vmem:[%s826] ss:$2 sm:$0xff]
        %s828 = scalar_lea.vmem %s804, 129 [#allocation2]
        %v829 = vld [vmem:[%s828] ss:$2 sm:$0xff]
        %s830 = scalar_lea.vmem %s804, 161 [#allocation2]
        %v831 = vld [vmem:[%s830] ss:$2 sm:$0xff]
        %s832 = scalar_lea.vmem %s804, 193 [#allocation2]
        %v833 = vld [vmem:[%s832] ss:$2 sm:$0xff]
        %s834 = scalar_lea.vmem %s804, 225 [#allocation2]
        %v835 = vld [vmem:[%s834] ss:$2 sm:$0xff]
        %v836 = vmax.f32 %v805, %v821
        %v837 = vmax.f32 %v807, %v823
        %v838 = vmax.f32 %v809, %v825
        %v839 = vmax.f32 %v811, %v827
        %v840 = vmax.f32 %v813, %v829
        %v841 = vmax.f32 %v815, %v831
        %v842 = vmax.f32 %v817, %v833
        %v843 = vmax.f32 %v819, %v835
        %v844 = vmax.f32 %v796, %v836
        %v845 = vmax.f32 %v797, %v837
        %v846 = vmax.f32 %v798, %v838
        %v847 = vmax.f32 %v799, %v839
        %v848 = vmax.f32 %v800, %v840
        %v849 = vmax.f32 %v801, %v841
        %v850 = vmax.f32 %v802, %v842
        %v851 = vmax.f32 %v803, %v843
        %852 = vst.msk [vmem:[#allocation3] sm:$0xff] %vm732, 0.0
        %vm853 = vcmask 254976
        %854 = vst.msk [vmem:[#allocation3 + $0x8] sm:$0x3] %vm853, 0.0
        %s855 = scalar_lea.vmem [#allocation3], 144
        %856 = vst.msk [vmem:[%s855] sm:$0xff] %vm732, 0.0
        %857 = vst.msk [vmem:[%s855 + $0x8] sm:$0x3] %vm853, 0.0
        %vm858 = vcmask 253952
        %859 = vst.msk [vmem:[#allocation3] sm:$0x1] %vm858, 0.0
        %860 = vst.msk [vmem:[#allocation3 + $0x10] sm:$0x1] %vm858, 0.0
        %861 = vst.msk [vmem:[#allocation3 + $0x20] sm:$0x1] %vm858, 0.0
        %862 = vst.msk [vmem:[#allocation3 + $0x30] sm:$0x1] %vm858, 0.0
        %863 = vst.msk [vmem:[#allocation3 + $0x40] sm:$0x1] %vm858, 0.0
        %864 = vst.msk [vmem:[#allocation3 + $0x50] sm:$0x1] %vm858, 0.0
        %865 = vst.msk [vmem:[#allocation3 + $0x60] sm:$0x1] %vm858, 0.0
        %866 = vst.msk [vmem:[#allocation3 + $0x70] sm:$0x1] %vm858, 0.0
        %867 = vst.msk [vmem:[#allocation3 + $0x80] sm:$0x1] %vm858, 0.0
        %868 = vst.msk [vmem:[#allocation3 + $0x90] sm:$0x1] %vm858, 0.0
        %869 = vst.msk [vmem:[#allocation3 + $0x9] sm:$0x1] %vm858, 0.0
        %870 = vst.msk [vmem:[#allocation3 + $0x19] sm:$0x1] %vm858, 0.0
        %871 = vst.msk [vmem:[#allocation3 + $0x29] sm:$0x1] %vm858, 0.0
        %872 = vst.msk [vmem:[#allocation3 + $0x39] sm:$0x1] %vm858, 0.0
        %873 = vst.msk [vmem:[#allocation3 + $0x49] sm:$0x1] %vm858, 0.0
        %874 = vst.msk [vmem:[#allocation3 + $0x59] sm:$0x1] %vm858, 0.0
        %875 = vst.msk [vmem:[#allocation3 + $0x69] sm:$0x1] %vm858, 0.0
        %876 = vst.msk [vmem:[#allocation3 + $0x79] sm:$0x1] %vm858, 0.0
        %877 = vst.msk [vmem:[#allocation3 + $0x89] sm:$0x1] %vm858, 0.0
        %878 = vst.msk [vmem:[#allocation3 + $0x99] sm:$0x1] %vm858, 0.0
        %s879 = scalar_lea.vmem [#allocation3], 16
        %880 = vst.msk [vmem:[%s879 + $0x1] sm:$0xff] %vm732, %v844
        %881 = vst.msk [vmem:[%s879 + $0x11] sm:$0xff] %vm732, %v845
        %882 = vst.msk [vmem:[%s879 + $0x21] sm:$0xff] %vm732, %v846
        %883 = vst.msk [vmem:[%s879 + $0x31] sm:$0xff] %vm732, %v847
        %884 = vst.msk [vmem:[%s879 + $0x41] sm:$0xff] %vm732, %v848
        %885 = vst.msk [vmem:[%s879 + $0x51] sm:$0xff] %vm732, %v849
        %886 = vst.msk [vmem:[%s879 + $0x61] sm:$0xff] %vm732, %v850
        %887 = vst.msk [vmem:[%s879 + $0x71] sm:$0xff] %vm732, %v851
        %v888 = vld [vmem:[#allocation3] sm:$0xff]
        %v889 = vld [vmem:[#allocation3 + $0x10] sm:$0xff]
        %v890 = vld [vmem:[#allocation3 + $0x20] sm:$0xff]
        %v891 = vld [vmem:[#allocation3 + $0x30] sm:$0xff]
        %v892 = vld [vmem:[#allocation3 + $0x40] sm:$0xff]
        %v893 = vld [vmem:[#allocation3 + $0x50] sm:$0xff]
        %v894 = vld [vmem:[#allocation3 + $0x60] sm:$0xff]
        %v895 = vld [vmem:[#allocation3 + $0x70] sm:$0xff]
        %v896 = vpack.c.bf16 %v888, %v888
        %v897 = vpack.c.bf16 %v889, %v889
        %v898 = vpack.c.bf16 %v890, %v890
        %v899 = vpack.c.bf16 %v891, %v891
        %v900 = vpack.c.bf16 %v892, %v892
        %v901 = vpack.c.bf16 %v893, %v893
        %v902 = vpack.c.bf16 %v894, %v894
        %v903 = vpack.c.bf16 %v895, %v895
        %v904 = vld [vmem:[#allocation3 + $0x1] sm:$0xff]
        %v905 = vld [vmem:[#allocation3 + $0x11] sm:$0xff]
        %v906 = vld [vmem:[#allocation3 + $0x21] sm:$0xff]
        %v907 = vld [vmem:[#allocation3 + $0x31] sm:$0xff]
        %v908 = vld [vmem:[#allocation3 + $0x41] sm:$0xff]
        %v909 = vld [vmem:[#allocation3 + $0x51] sm:$0xff]
        %v910 = vld [vmem:[#allocation3 + $0x61] sm:$0xff]
        %v911 = vld [vmem:[#allocation3 + $0x71] sm:$0xff]
        %v912 = vpack.c.bf16 %v904, %v904
        %v913 = vpack.c.bf16 %v905, %v905
        %v914 = vpack.c.bf16 %v906, %v906
        %v915 = vpack.c.bf16 %v907, %v907
        %v916 = vpack.c.bf16 %v908, %v908
        %v917 = vpack.c.bf16 %v909, %v909
        %v918 = vpack.c.bf16 %v910, %v910
        %v919 = vpack.c.bf16 %v911, %v911
        %v920 = vld [vmem:[#allocation3 + $0x2] sm:$0xff]
        %v921 = vld [vmem:[#allocation3 + $0x12] sm:$0xff]
        %v922 = vld [vmem:[#allocation3 + $0x22] sm:$0xff]
        %v923 = vld [vmem:[#allocation3 + $0x32] sm:$0xff]
        %v924 = vld [vmem:[#allocation3 + $0x42] sm:$0xff]
        %v925 = vld [vmem:[#allocation3 + $0x52] sm:$0xff]
        %v926 = vld [vmem:[#allocation3 + $0x62] sm:$0xff]
        %v927 = vld [vmem:[#allocation3 + $0x72] sm:$0xff]
        %v928 = vpack.c.bf16 %v920, %v920
        %v929 = vpack.c.bf16 %v921, %v921
        %v930 = vpack.c.bf16 %v922, %v922
        %v931 = vpack.c.bf16 %v923, %v923
        %v932 = vpack.c.bf16 %v924, %v924
        %v933 = vpack.c.bf16 %v925, %v925
        %v934 = vpack.c.bf16 %v926, %v926
        %v935 = vpack.c.bf16 %v927, %v927
        %v936 = vld [vmem:[%s879] sm:$0xff]
        %v937 = vld [vmem:[%s879 + $0x10] sm:$0xff]
        %v938 = vld [vmem:[%s879 + $0x20] sm:$0xff]
        %v939 = vld [vmem:[%s879 + $0x30] sm:$0xff]
        %v940 = vld [vmem:[%s879 + $0x40] sm:$0xff]
        %v941 = vld [vmem:[%s879 + $0x50] sm:$0xff]
        %v942 = vld [vmem:[%s879 + $0x60] sm:$0xff]
        %v943 = vld [vmem:[%s879 + $0x70] sm:$0xff]
        %v944 = vpack.c.bf16 %v936, %v936
        %v945 = vpack.c.bf16 %v937, %v937
        %v946 = vpack.c.bf16 %v938, %v938
        %v947 = vpack.c.bf16 %v939, %v939
        %v948 = vpack.c.bf16 %v940, %v940
        %v949 = vpack.c.bf16 %v941, %v941
        %v950 = vpack.c.bf16 %v942, %v942
        %v951 = vpack.c.bf16 %v943, %v943
        %v952 = vld [vmem:[%s879 + $0x1] sm:$0xff]
        %v953 = vld [vmem:[%s879 + $0x11] sm:$0xff]
        %v954 = vld [vmem:[%s879 + $0x21] sm:$0xff]
        %v955 = vld [vmem:[%s879 + $0x31] sm:$0xff]
        %v956 = vld [vmem:[%s879 + $0x41] sm:$0xff]
        %v957 = vld [vmem:[%s879 + $0x51] sm:$0xff]
        %v958 = vld [vmem:[%s879 + $0x61] sm:$0xff]
        %v959 = vld [vmem:[%s879 + $0x71] sm:$0xff]
        %v960 = vpack.c.bf16 %v952, %v952
        %v961 = vpack.c.bf16 %v953, %v953
        %v962 = vpack.c.bf16 %v954, %v954
        %v963 = vpack.c.bf16 %v955, %v955
        %v964 = vpack.c.bf16 %v956, %v956
        %v965 = vpack.c.bf16 %v957, %v957
        %v966 = vpack.c.bf16 %v958, %v958
        %v967 = vpack.c.bf16 %v959, %v959
        %v968 = vld [vmem:[%s879 + $0x2] sm:$0xff]
        %v969 = vld [vmem:[%s879 + $0x12] sm:$0xff]
        %v970 = vld [vmem:[%s879 + $0x22] sm:$0xff]
        %v971 = vld [vmem:[%s879 + $0x32] sm:$0xff]
        %v972 = vld [vmem:[%s879 + $0x42] sm:$0xff]
        %v973 = vld [vmem:[%s879 + $0x52] sm:$0xff]
        %v974 = vld [vmem:[%s879 + $0x62] sm:$0xff]
        %v975 = vld [vmem:[%s879 + $0x72] sm:$0xff]
        %v976 = vpack.c.bf16 %v968, %v968
        %v977 = vpack.c.bf16 %v969, %v969
        %v978 = vpack.c.bf16 %v970, %v970
        %v979 = vpack.c.bf16 %v971, %v971
        %v980 = vpack.c.bf16 %v972, %v972
        %v981 = vpack.c.bf16 %v973, %v973
        %v982 = vpack.c.bf16 %v974, %v974
        %v983 = vpack.c.bf16 %v975, %v975
        %s984 = scalar_lea.vmem [#allocation3], 32
        %v985 = vld [vmem:[%s984] sm:$0xff]
        %v986 = vld [vmem:[%s984 + $0x10] sm:$0xff]
        %v987 = vld [vmem:[%s984 + $0x20] sm:$0xff]
        %v988 = vld [vmem:[%s984 + $0x30] sm:$0xff]
        %v989 = vld [vmem:[%s984 + $0x40] sm:$0xff]
        %v990 = vld [vmem:[%s984 + $0x50] sm:$0xff]
        %v991 = vld [vmem:[%s984 + $0x60] sm:$0xff]
        %v992 = vld [vmem:[%s984 + $0x70] sm:$0xff]
        %v993 = vpack.c.bf16 %v985, %v985
        %v994 = vpack.c.bf16 %v986, %v986
        %v995 = vpack.c.bf16 %v987, %v987
        %v996 = vpack.c.bf16 %v988, %v988
        %v997 = vpack.c.bf16 %v989, %v989
        %v998 = vpack.c.bf16 %v990, %v990
        %v999 = vpack.c.bf16 %v991, %v991
        %v1000 = vpack.c.bf16 %v992, %v992
        %v1001 = vld [vmem:[%s984 + $0x1] sm:$0xff]
        %v1002 = vld [vmem:[%s984 + $0x11] sm:$0xff]
        %v1003 = vld [vmem:[%s984 + $0x21] sm:$0xff]
        %v1004 = vld [vmem:[%s984 + $0x31] sm:$0xff]
        %v1005 = vld [vmem:[%s984 + $0x41] sm:$0xff]
        %v1006 = vld [vmem:[%s984 + $0x51] sm:$0xff]
        %v1007 = vld [vmem:[%s984 + $0x61] sm:$0xff]
        %v1008 = vld [vmem:[%s984 + $0x71] sm:$0xff]
        %v1009 = vpack.c.bf16 %v1001, %v1001
        %v1010 = vpack.c.bf16 %v1002, %v1002
        %v1011 = vpack.c.bf16 %v1003, %v1003
        %v1012 = vpack.c.bf16 %v1004, %v1004
        %v1013 = vpack.c.bf16 %v1005, %v1005
        %v1014 = vpack.c.bf16 %v1006, %v1006
        %v1015 = vpack.c.bf16 %v1007, %v1007
        %v1016 = vpack.c.bf16 %v1008, %v1008
        %v1017 = vld [vmem:[%s984 + $0x2] sm:$0xff]
        %v1018 = vld [vmem:[%s984 + $0x12] sm:$0xff]
        %v1019 = vld [vmem:[%s984 + $0x22] sm:$0xff]
        %v1020 = vld [vmem:[%s984 + $0x32] sm:$0xff]
        %v1021 = vld [vmem:[%s984 + $0x42] sm:$0xff]
        %v1022 = vld [vmem:[%s984 + $0x52] sm:$0xff]
        %v1023 = vld [vmem:[%s984 + $0x62] sm:$0xff]
        %v1024 = vld [vmem:[%s984 + $0x72] sm:$0xff]
        %v1025 = vpack.c.bf16 %v1017, %v1017
        %v1026 = vpack.c.bf16 %v1018, %v1018
        %v1027 = vpack.c.bf16 %v1019, %v1019
        %v1028 = vpack.c.bf16 %v1020, %v1020
        %v1029 = vpack.c.bf16 %v1021, %v1021
        %v1030 = vpack.c.bf16 %v1022, %v1022
        %v1031 = vpack.c.bf16 %v1023, %v1023
        %v1032 = vpack.c.bf16 %v1024, %v1024
        %1041 = vrot.lane.b32.xlu0 %v912, 32
        %v1042 = vpop.permute.xlu0 %1041
        %1043 = vrot.lane.b32.xlu0 %v913, 32
        %v1044 = vpop.permute.xlu0 %1043
        %1045 = vrot.lane.b32.xlu0 %v914, 32
        %v1046 = vpop.permute.xlu0 %1045
        %1047 = vrot.lane.b32.xlu0 %v915, 32
        %v1048 = vpop.permute.xlu0 %1047
        %1049 = vrot.lane.b32.xlu0 %v916, 32
        %v1050 = vpop.permute.xlu0 %1049
        %1051 = vrot.lane.b32.xlu0 %v917, 32
        %v1052 = vpop.permute.xlu0 %1051
        %1053 = vrot.lane.b32.xlu0 %v918, 32
        %v1054 = vpop.permute.xlu0 %1053
        %1055 = vrot.lane.b32.xlu0 %v919, 32
        %v1056 = vpop.permute.xlu0 %1055
        %1065 = vrot.lane.b32.xlu0 %v928, 64
        %v1066 = vpop.permute.xlu0 %1065
        %1067 = vrot.lane.b32.xlu0 %v929, 64
        %v1068 = vpop.permute.xlu0 %1067
        %1069 = vrot.lane.b32.xlu0 %v930, 64
        %v1070 = vpop.permute.xlu0 %1069
        %1071 = vrot.lane.b32.xlu0 %v931, 64
        %v1072 = vpop.permute.xlu0 %1071
        %1073 = vrot.lane.b32.xlu0 %v932, 64
        %v1074 = vpop.permute.xlu0 %1073
        %1075 = vrot.lane.b32.xlu0 %v933, 64
        %v1076 = vpop.permute.xlu0 %1075
        %1077 = vrot.lane.b32.xlu0 %v934, 64
        %v1078 = vpop.permute.xlu0 %1077
        %1079 = vrot.lane.b32.xlu0 %v935, 64
        %v1080 = vpop.permute.xlu0 %1079
        %1089 = vrot.lane.b32.xlu0 %v944, 96
        %v1090 = vpop.permute.xlu0 %1089
        %1091 = vrot.lane.b32.xlu0 %v945, 96
        %v1092 = vpop.permute.xlu0 %1091
        %1093 = vrot.lane.b32.xlu0 %v946, 96
        %v1094 = vpop.permute.xlu0 %1093
        %1095 = vrot.lane.b32.xlu0 %v947, 96
        %v1096 = vpop.permute.xlu0 %1095
        %1097 = vrot.lane.b32.xlu0 %v948, 96
        %v1098 = vpop.permute.xlu0 %1097
        %1099 = vrot.lane.b32.xlu0 %v949, 96
        %v1100 = vpop.permute.xlu0 %1099
        %1101 = vrot.lane.b32.xlu0 %v950, 96
        %v1102 = vpop.permute.xlu0 %1101
        %1103 = vrot.lane.b32.xlu0 %v951, 96
        %v1104 = vpop.permute.xlu0 %1103
        %1113 = vrot.lane.b32.xlu0 %v976, 32
        %v1114 = vpop.permute.xlu0 %1113
        %1115 = vrot.lane.b32.xlu0 %v977, 32
        %v1116 = vpop.permute.xlu0 %1115
        %1117 = vrot.lane.b32.xlu0 %v978, 32
        %v1118 = vpop.permute.xlu0 %1117
        %1119 = vrot.lane.b32.xlu0 %v979, 32
        %v1120 = vpop.permute.xlu0 %1119
        %1121 = vrot.lane.b32.xlu0 %v980, 32
        %v1122 = vpop.permute.xlu0 %1121
        %1123 = vrot.lane.b32.xlu0 %v981, 32
        %v1124 = vpop.permute.xlu0 %1123
        %1125 = vrot.lane.b32.xlu0 %v982, 32
        %v1126 = vpop.permute.xlu0 %1125
        %1127 = vrot.lane.b32.xlu0 %v983, 32
        %v1128 = vpop.permute.xlu0 %1127
        %1137 = vrot.lane.b32.xlu0 %v993, 64
        %v1138 = vpop.permute.xlu0 %1137
        %1139 = vrot.lane.b32.xlu0 %v994, 64
        %v1140 = vpop.permute.xlu0 %1139
        %1141 = vrot.lane.b32.xlu0 %v995, 64
        %v1142 = vpop.permute.xlu0 %1141
        %1143 = vrot.lane.b32.xlu0 %v996, 64
        %v1144 = vpop.permute.xlu0 %1143
        %1145 = vrot.lane.b32.xlu0 %v997, 64
        %v1146 = vpop.permute.xlu0 %1145
        %1147 = vrot.lane.b32.xlu0 %v998, 64
        %v1148 = vpop.permute.xlu0 %1147
        %1149 = vrot.lane.b32.xlu0 %v999, 64
        %v1150 = vpop.permute.xlu0 %1149
        %1151 = vrot.lane.b32.xlu0 %v1000, 64
        %v1152 = vpop.permute.xlu0 %1151
        %1161 = vrot.lane.b32.xlu0 %v1009, 96
        %v1162 = vpop.permute.xlu0 %1161
        %1163 = vrot.lane.b32.xlu0 %v1010, 96
        %v1164 = vpop.permute.xlu0 %1163
        %1165 = vrot.lane.b32.xlu0 %v1011, 96
        %v1166 = vpop.permute.xlu0 %1165
        %1167 = vrot.lane.b32.xlu0 %v1012, 96
        %v1168 = vpop.permute.xlu0 %1167
        %1169 = vrot.lane.b32.xlu0 %v1013, 96
        %v1170 = vpop.permute.xlu0 %1169
        %1171 = vrot.lane.b32.xlu0 %v1014, 96
        %v1172 = vpop.permute.xlu0 %1171
        %1173 = vrot.lane.b32.xlu0 %v1015, 96
        %v1174 = vpop.permute.xlu0 %1173
        %1175 = vrot.lane.b32.xlu0 %v1016, 96
        %v1176 = vpop.permute.xlu0 %1175
        %v1179 = vsel %vm732, %v896, %v1042
        %v1182 = vsel %vm732, %v897, %v1044
        %v1185 = vsel %vm732, %v898, %v1046
        %v1188 = vsel %vm732, %v899, %v1048
        %v1191 = vsel %vm732, %v900, %v1050
        %v1194 = vsel %vm732, %v901, %v1052
        %v1197 = vsel %vm732, %v902, %v1054
        %v1200 = vsel %vm732, %v903, %v1056
        %vm1201 = vcmask 523264
        %v1203 = vsel %vm1201, %v1179, %v1066
        %v1205 = vsel %vm1201, %v1182, %v1068
        %v1207 = vsel %vm1201, %v1185, %v1070
        %v1209 = vsel %vm1201, %v1188, %v1072
        %v1211 = vsel %vm1201, %v1191, %v1074
        %v1213 = vsel %vm1201, %v1194, %v1076
        %v1215 = vsel %vm1201, %v1197, %v1078
        %v1217 = vsel %vm1201, %v1200, %v1080
        %vm1218 = vcmask 785408
        %v1220 = vsel %vm1218, %v1203, %v1090
        %v1222 = vsel %vm1218, %v1205, %v1092
        %v1224 = vsel %vm1218, %v1207, %v1094
        %v1226 = vsel %vm1218, %v1209, %v1096
        %v1228 = vsel %vm1218, %v1211, %v1098
        %v1230 = vsel %vm1218, %v1213, %v1100
        %v1232 = vsel %vm1218, %v1215, %v1102
        %v1234 = vsel %vm1218, %v1217, %v1104
        %v1237 = vsel %vm732, %v960, %v1114
        %v1240 = vsel %vm732, %v961, %v1116
        %v1243 = vsel %vm732, %v962, %v1118
        %v1246 = vsel %vm732, %v963, %v1120
        %v1249 = vsel %vm732, %v964, %v1122
        %v1252 = vsel %vm732, %v965, %v1124
        %v1255 = vsel %vm732, %v966, %v1126
        %v1258 = vsel %vm732, %v967, %v1128
        %v1260 = vsel %vm1201, %v1237, %v1138
        %v1262 = vsel %vm1201, %v1240, %v1140
        %v1264 = vsel %vm1201, %v1243, %v1142
        %v1266 = vsel %vm1201, %v1246, %v1144
        %v1268 = vsel %vm1201, %v1249, %v1146
        %v1270 = vsel %vm1201, %v1252, %v1148
        %v1272 = vsel %vm1201, %v1255, %v1150
        %v1274 = vsel %vm1201, %v1258, %v1152
        %v1276 = vsel %vm1218, %v1260, %v1162
        %v1278 = vsel %vm1218, %v1262, %v1164
        %v1280 = vsel %vm1218, %v1264, %v1166
        %v1282 = vsel %vm1218, %v1266, %v1168
        %v1284 = vsel %vm1218, %v1268, %v1170
        %v1286 = vsel %vm1218, %v1270, %v1172
        %v1288 = vsel %vm1218, %v1272, %v1174
        %v1290 = vsel %vm1218, %v1274, %v1176
        %v1315 = vunpack.c.l.b16 %v1220
        %v1316 = vunpack.c.l.b16 %v1276
        %v1317 = vunpack.c.l.b16 %v1025
        %v1318 = vunpack.c.l.b16 %v1222
        %v1319 = vunpack.c.l.b16 %v1278
        %v1320 = vunpack.c.l.b16 %v1026
        %v1321 = vunpack.c.l.b16 %v1224
        %v1322 = vunpack.c.l.b16 %v1280
        %v1323 = vunpack.c.l.b16 %v1027
        %v1324 = vunpack.c.l.b16 %v1226
        %v1325 = vunpack.c.l.b16 %v1282
        %v1326 = vunpack.c.l.b16 %v1028
        %v1327 = vunpack.c.l.b16 %v1228
        %v1328 = vunpack.c.l.b16 %v1284
        %v1329 = vunpack.c.l.b16 %v1029
        %v1330 = vunpack.c.l.b16 %v1230
        %v1331 = vunpack.c.l.b16 %v1286
        %v1332 = vunpack.c.l.b16 %v1030
        %v1333 = vunpack.c.l.b16 %v1232
        %v1334 = vunpack.c.l.b16 %v1288
        %v1335 = vunpack.c.l.b16 %v1031
        %v1336 = vunpack.c.l.b16 %v1234
        %v1337 = vunpack.c.l.b16 %v1290
        %v1338 = vunpack.c.l.b16 %v1032
        %v1339 = vld [vmem:[%s3] sm:$0xf]
        %v1340 = vld [vmem:[%s3 + $0x4] sm:$0xf]
        %v1341 = vld [vmem:[%s3 + $0x8] sm:$0xf]
        %v1342 = vld [vmem:[%s3 + $0xc] sm:$0xf]
        %v1343 = vld [vmem:[%s3 + $0x10] sm:$0xf]
        %v1344 = vld [vmem:[%s3 + $0x14] sm:$0xf]
        %v1345 = vld [vmem:[%s3 + $0x18] sm:$0xf]
        %v1346 = vld [vmem:[%s3 + $0x1c] sm:$0xf]
        %v1347 = vld [vmem:[%s3 + $0x20] sm:$0xf]
        %v1348 = vld [vmem:[%s3 + $0x24] sm:$0xf]
        %v1349 = vld [vmem:[%s3 + $0x28] sm:$0xf]
        %v1350 = vld [vmem:[%s3 + $0x2c] sm:$0xf]
        %v1351 = vld [vmem:[%s3 + $0x30] sm:$0xf]
        %v1352 = vld [vmem:[%s3 + $0x34] sm:$0xf]
        %v1353 = vld [vmem:[%s3 + $0x38] sm:$0xf]
        %v1354 = vld [vmem:[%s3 + $0x3c] sm:$0xf]
        %v1355 = vld [vmem:[%s3 + $0x40] sm:$0xf]
        %v1356 = vld [vmem:[%s3 + $0x44] sm:$0xf]
        %v1357 = vld [vmem:[%s3 + $0x48] sm:$0xf]
        %v1358 = vld [vmem:[%s3 + $0x4c] sm:$0xf]
        %v1359 = vld [vmem:[%s3 + $0x50] sm:$0xf]
        %v1360 = vld [vmem:[%s3 + $0x54] sm:$0xf]
        %v1361 = vld [vmem:[%s3 + $0x58] sm:$0xf]
        %v1362 = vld [vmem:[%s3 + $0x5c] sm:$0xf]
        %v1363 = vld [vmem:[%s3 + $0x60] sm:$0xf]
        %v1364 = vld [vmem:[%s3 + $0x64] sm:$0xf]
        %v1365 = vld [vmem:[%s3 + $0x68] sm:$0xf]
        %v1366 = vld [vmem:[%s3 + $0x6c] sm:$0xf]
        %v1367 = vld [vmem:[%s3 + $0x70] sm:$0xf]
        %v1368 = vld [vmem:[%s3 + $0x74] sm:$0xf]
        %v1369 = vld [vmem:[%s3 + $0x78] sm:$0xf]
        %v1370 = vld [vmem:[%s3 + $0x7c] sm:$0xf]
        %v1371 = vld [vmem:[%s3 + $0x80] sm:$0xf]
        %v1372 = vld [vmem:[%s3 + $0x84] sm:$0xf]
        %v1373 = vld [vmem:[%s3 + $0x88] sm:$0xf]
        %v1374 = vld [vmem:[%s3 + $0x8c] sm:$0xf]
        %v1375 = vld [vmem:[%s4] sm:$0x1]
        %v1377 = vlaneseq
        %v1378 = vshrl.u32 %v1377, 7
        %v1379 = vsub.s32 0, %v1378
        %v1380 = vrot.slane %v1375, %v1379
        %v1382 = vpack.c.b16 %v1318, %v1315
        %v1383 = vpack.c.b16 %v1319, %v1316
        %v1384 = vpack.c.b16 %v1320, %v1317
        %v1385 = vpack.c.b16 %v1324, %v1321
        %v1386 = vpack.c.b16 %v1325, %v1322
        %v1387 = vpack.c.b16 %v1326, %v1323
        %v1388 = vpack.c.b16 %v1330, %v1327
        %v1389 = vpack.c.b16 %v1331, %v1328
        %v1390 = vpack.c.b16 %v1332, %v1329
        %v1391 = vpack.c.b16 %v1336, %v1333
        %v1392 = vpack.c.b16 %v1337, %v1334
        %v1393 = vpack.c.b16 %v1338, %v1335
        %v1438 = vunpack.c.l.b16 %v1339
        %v1439 = vunpack.c.l.b16 %v1340
        %v1440 = vunpack.c.l.b16 %v1341
        %v1441 = vunpack.c.l.b16 %v1342
        %v1442 = vunpack.c.l.b16 %v1343
        %v1443 = vunpack.c.l.b16 %v1344
        %v1444 = vunpack.c.l.b16 %v1345
        %v1445 = vunpack.c.l.b16 %v1346
        %v1446 = vunpack.c.l.b16 %v1347
        %v1447 = vunpack.c.l.b16 %v1348
        %v1448 = vunpack.c.l.b16 %v1349
        %v1449 = vunpack.c.l.b16 %v1350
        %v1450 = vunpack.c.l.b16 %v1351
        %v1451 = vunpack.c.l.b16 %v1352
        %v1452 = vunpack.c.l.b16 %v1353
        %v1453 = vunpack.c.l.b16 %v1354
        %v1454 = vunpack.c.l.b16 %v1355
        %v1455 = vunpack.c.l.b16 %v1356
        %v1456 = vunpack.c.l.b16 %v1357
        %v1457 = vunpack.c.l.b16 %v1358
        %v1458 = vunpack.c.l.b16 %v1359
        %v1459 = vunpack.c.l.b16 %v1360
        %v1460 = vunpack.c.l.b16 %v1361
        %v1461 = vunpack.c.l.b16 %v1362
        %v1462 = vunpack.c.l.b16 %v1363
        %v1463 = vunpack.c.l.b16 %v1364
        %v1464 = vunpack.c.l.b16 %v1365
        %v1465 = vunpack.c.l.b16 %v1366
        %v1466 = vunpack.c.l.b16 %v1367
        %v1467 = vunpack.c.l.b16 %v1368
        %v1468 = vunpack.c.l.b16 %v1369
        %v1469 = vunpack.c.l.b16 %v1370
        %v1470 = vunpack.c.l.b16 %v1371
        %v1471 = vunpack.c.l.b16 %v1372
        %v1472 = vunpack.c.l.b16 %v1373
        %v1473 = vunpack.c.l.b16 %v1374
        %v1474 = vpack.c.b16 %v1439, %v1438
        %v1475 = vpack.c.b16 %v1441, %v1440
        %v1476 = vpack.c.b16 %v1443, %v1442
        %v1477 = vpack.c.b16 %v1445, %v1444
        %v1478 = vpack.c.b16 %v1447, %v1446
        %v1479 = vpack.c.b16 %v1449, %v1448
        %v1480 = vpack.c.b16 %v1451, %v1450
        %v1481 = vpack.c.b16 %v1453, %v1452
        %v1482 = vpack.c.b16 %v1455, %v1454
        %v1483 = vpack.c.b16 %v1457, %v1456
        %v1484 = vpack.c.b16 %v1459, %v1458
        %v1485 = vpack.c.b16 %v1461, %v1460
        %v1486 = vpack.c.b16 %v1463, %v1462
        %v1487 = vpack.c.b16 %v1465, %v1464
        %v1488 = vpack.c.b16 %v1467, %v1466
        %v1489 = vpack.c.b16 %v1469, %v1468
        %v1490 = vpack.c.b16 %v1471, %v1470
        %v1491 = vpack.c.b16 %v1473, %v1472
        %v1511 = vsel %vm732, %v1384, 0
        %v1514 = vsel %vm732, %v1387, 0
        %v1517 = vsel %vm732, %v1390, 0
        %v1520 = vsel %vm732, %v1393, 0
        %1522 = vmatprep.subr.bf16.mxu0 0
        %1523 = vmatpush1.bf16.msra.mxu0 %v1474
        %1524 = vmatprep.subr.bf16.mxu0 0
        %1525 = vmatpush1.bf16.msra.mxu0 %v1475
        %1526 = vmatprep.subr.bf16.mxu0 0
        %1527 = vmatpush1.bf16.msra.mxu0 %v1476
        %1528 = vmatprep.subr.bf16.mxu0 0
        %1529 = vmatpush1.bf16.msra.mxu0 %v1477
        %1530 = vmatprep.subr.bf16.mxu0 0
        %1531 = vmatpush1.bf16.msra.mxu0 %v1478
        %1532 = vmatprep.subr.bf16.mxu0 0
        %1533 = vmatpush1.bf16.msra.mxu0 %v1479
        %1534 = vmatprep.subr.bf16.mxu0 0
        %1535 = vmatpush1.bf16.msra.mxu0 %v1480
        %1536 = vmatprep.subr.bf16.mxu0 0
        %1537 = vmatpush1.bf16.msra.mxu0 %v1481
        %1538 = vmatprep.subr.bf16.mxu0 0
        %1539 = vmatpush1.bf16.msra.mxu0 %v1482
        %1540 = vmatprep.subr.bf16.mxu0 0
        %1541 = vmatpush1.bf16.msra.mxu0 %v1483
        %1542 = vmatprep.subr.bf16.mxu0 0
        %1543 = vmatpush1.bf16.msra.mxu0 %v1484
        %1544 = vmatprep.subr.bf16.mxu0 0
        %1545 = vmatpush1.bf16.msra.mxu0 %v1485
        %1546 = vmatprep.subr.bf16.mxu0 0
        %1547 = vmatpush1.bf16.msra.mxu0 %v1486
        %1548 = vmatprep.subr.bf16.mxu0 0
        %1549 = vmatpush1.bf16.msra.mxu0 %v1487
        %1550 = vmatprep.subr.bf16.mxu0 0
        %1551 = vmatpush1.bf16.msra.mxu0 %v1488
        %1552 = vmatprep.subr.bf16.mxu0 0
        %1553 = vmatpush1.bf16.msra.mxu0 %v1489
        %1554 = vmatprep.mubr.bf16.mxu0 %v1383
        %1555 = vmatmul.mubr.bf16.gmra.mrb[0].mxu0 %v1382
        %v1556 = vpop.f32.mrb[0].mxu0
        %v1557 = vadd.f32 %v1380, %v1556
        %v1558 = vpop.f32.mrb[0].mxu0
        %v1559 = vpop.f32.mrb[0].mxu0
        %v1560 = vadd.f32 %v1380, %v1559
        %v1561 = vpop.f32.mrb[0].mxu0
        %1562 = vmatprep.mubr.bf16.mxu0 %v1386
        %1563 = vmatmul.mubr.bf16.gmra.mrb[0].mxu0 %v1385
        %v1564 = vpop.f32.mrb[0].mxu0
        %v1565 = vadd.f32 %v1380, %v1564
        %v1566 = vpop.f32.mrb[0].mxu0
        %v1567 = vpop.f32.mrb[0].mxu0
        %v1568 = vadd.f32 %v1380, %v1567
        %v1569 = vpop.f32.mrb[0].mxu0
        %1570 = vmatprep.mubr.bf16.mxu0 %v1389
        %1571 = vmatmul.mubr.bf16.gmra.mrb[0].mxu0 %v1388
        %v1572 = vpop.f32.mrb[0].mxu0
        %v1573 = vadd.f32 %v1380, %v1572
        %v1574 = vpop.f32.mrb[0].mxu0
        %v1575 = vpop.f32.mrb[0].mxu0
        %v1576 = vadd.f32 %v1380, %v1575
        %v1577 = vpop.f32.mrb[0].mxu0
        %1578 = vmatprep.mubr.bf16.mxu0 %v1392
        %1579 = vmatmul.mubr.bf16.gmra.mrb[0].mxu0 %v1391
        %v1580 = vpop.f32.mrb[0].mxu0
        %v1581 = vadd.f32 %v1380, %v1580
        %v1582 = vpop.f32.mrb[0].mxu0
        %v1583 = vpop.f32.mrb[0].mxu0
        %v1584 = vadd.f32 %v1380, %v1583
        %v1585 = vpop.f32.mrb[0].mxu0
        %1586 = vdwg.mxu0
        %1587 = vmatprep.subr.bf16.mxu0 0
        %1588 = vmatpush1.bf16.msra.mxu0 %v1490
        %1589 = vmatprep.subr.bf16.mxu0 0
        %1590 = vmatpush1.bf16.msra.mxu0 %v1491
        %1591 = vmatprep.subr.bf16.mxu0 0
        %1592 = vmatpush1.bf16.msra.mxu0 0
        %1593 = vmatprep.subr.bf16.mxu0 0
        %1594 = vmatpush1.bf16.msra.mxu0 0
        %1595 = vmatprep.subr.bf16.mxu0 0
        %1596 = vmatpush1.bf16.msra.mxu0 0
        %1597 = vmatprep.subr.bf16.mxu0 0
        %1598 = vmatpush1.bf16.msra.mxu0 0
        %1599 = vmatprep.subr.bf16.mxu0 0
        %1600 = vmatpush1.bf16.msra.mxu0 0
        %1601 = vmatprep.subr.bf16.mxu0 0
        %1602 = vmatpush1.bf16.msra.mxu0 0
        %1603 = vmatprep.subr.bf16.mxu0 0
        %1604 = vmatpush1.bf16.msra.mxu0 0
        %1605 = vmatprep.subr.bf16.mxu0 0
        %1606 = vmatpush1.bf16.msra.mxu0 0
        %1607 = vmatprep.subr.bf16.mxu0 0
        %1608 = vmatpush1.bf16.msra.mxu0 0
        %1609 = vmatprep.subr.bf16.mxu0 0
        %1610 = vmatpush1.bf16.msra.mxu0 0
        %1611 = vmatprep.subr.bf16.mxu0 0
        %1612 = vmatpush1.bf16.msra.mxu0 0
        %1613 = vmatprep.subr.bf16.mxu0 0
        %1614 = vmatpush1.bf16.msra.mxu0 0
        %1615 = vmatprep.subr.bf16.mxu0 0
        %1616 = vmatpush1.bf16.msra.mxu0 0
        %1617 = vmatprep.subr.bf16.mxu0 0
        %1618 = vmatpush1.bf16.msra.mxu0 0
        %1619 = vmatprep.mubr.bf16.mxu0 0
        %1620 = vmatmul.mubr.bf16.gmra.mrb[0].mxu0 %v1511
        %v1621 = vpop.f32.mrb[0].mxu0
        %v1622 = vadd.f32 %v1557, %v1621
        %v1623 = vpop.f32.mrb[0].mxu0
        %v1624 = vpop.f32.mrb[0].mxu0
        %v1625 = vadd.f32 %v1560, %v1624
        %v1626 = vpop.f32.mrb[0].mxu0
        %1627 = vmatprep.mubr.bf16.mxu0 0
        %1628 = vmatmul.mubr.bf16.gmra.mrb[0].mxu0 %v1514
        %v1629 = vpop.f32.mrb[0].mxu0
        %v1630 = vadd.f32 %v1565, %v1629
        %v1631 = vpop.f32.mrb[0].mxu0
        %v1632 = vpop.f32.mrb[0].mxu0
        %v1633 = vadd.f32 %v1568, %v1632
        %v1634 = vpop.f32.mrb[0].mxu0
        %1635 = vmatprep.mubr.bf16.mxu0 0
        %1636 = vmatmul.mubr.bf16.gmra.mrb[0].mxu0 %v1517
        %v1637 = vpop.f32.mrb[0].mxu0
        %v1638 = vadd.f32 %v1573, %v1637
        %v1639 = vpop.f32.mrb[0].mxu0
        %v1640 = vpop.f32.mrb[0].mxu0
        %v1641 = vadd.f32 %v1576, %v1640
        %v1642 = vpop.f32.mrb[0].mxu0
        %1643 = vmatprep.mubr.bf16.mxu0 0
        %1644 = vmatmul.mubr.bf16.gmra.mrb[0].mxu0 %v1520
        %v1645 = vpop.f32.mrb[0].mxu0
        %v1646 = vadd.f32 %v1581, %v1645
        %v1647 = vpop.f32.mrb[0].mxu0
        %v1648 = vpop.f32.mrb[0].mxu0
        %v1649 = vadd.f32 %v1584, %v1648
        %v1650 = vpop.f32.mrb[0].mxu0
        %1651 = vdwg.mxu0
        %v1652 = vmax.f32 %v1622, 0.0
        %v1653 = vmax.f32 %v1625, 0.0
        %v1654 = vmax.f32 %v1630, 0.0
        %v1655 = vmax.f32 %v1633, 0.0
        %v1656 = vmax.f32 %v1638, 0.0
        %v1657 = vmax.f32 %v1641, 0.0
        %v1658 = vmax.f32 %v1646, 0.0
        %v1659 = vmax.f32 %v1649, 0.0
        %1660 = vst.msk [vmem:[#allocation4] sm:$0xff] %vm1201, %v1652
        %1661 = vst.msk [vmem:[#allocation4 + $0x8] sm:$0xff] %vm1201, %v1653
        %1662 = vst.msk [vmem:[#allocation4 + $0x10] sm:$0xff] %vm1201, %v1654
        %1663 = vst.msk [vmem:[#allocation4 + $0x18] sm:$0xff] %vm1201, %v1655
        %1664 = vst.msk [vmem:[#allocation4 + $0x20] sm:$0xff] %vm1201, %v1656
        %1665 = vst.msk [vmem:[#allocation4 + $0x28] sm:$0xff] %vm1201, %v1657
        %1666 = vst.msk [vmem:[#allocation4 + $0x30] sm:$0xff] %vm1201, %v1658
        %1667 = vst.msk [vmem:[#allocation4 + $0x38] sm:$0xff] %vm1201, %v1659
        %v1668 = vld [vmem:[#allocation4] ss:$2 sm:$0xf]
        %s1669 = scalar_lea.vmem [#allocation4], 16
        %v1670 = vld [vmem:[%s1669] ss:$2 sm:$0xf]
        %s1671 = scalar_lea.vmem [#allocation4], 32
        %v1672 = vld [vmem:[%s1671] ss:$2 sm:$0xf]
        %s1673 = scalar_lea.vmem [#allocation4], 48
        %v1674 = vld [vmem:[%s1673] ss:$2 sm:$0xf]
        %s1675 = scalar_lea.vmem [#allocation4], 1
        %v1676 = vld [vmem:[%s1675] ss:$2 sm:$0xf]
        %s1677 = scalar_lea.vmem [#allocation4], 17
        %v1678 = vld [vmem:[%s1677] ss:$2 sm:$0xf]
        %s1679 = scalar_lea.vmem [#allocation4], 33
        %v1680 = vld [vmem:[%s1679] ss:$2 sm:$0xf]
        %s1681 = scalar_lea.vmem [#allocation4], 49
        %v1682 = vld [vmem:[%s1681] ss:$2 sm:$0xf]
        %v1683 = vmax.f32 %v1668, %v1676
        %v1684 = vmax.f32 %v1670, %v1678
        %v1685 = vmax.f32 %v1672, %v1680
        %v1686 = vmax.f32 %v1674, %v1682
        %s1687 = scalar_lea.vmem [#allocation4], 8
        %v1688 = vld [vmem:[%s1687] ss:$2 sm:$0xf]
        %s1689 = scalar_lea.vmem %s1687, 16 [#allocation4]
        %v1690 = vld [vmem:[%s1689] ss:$2 sm:$0xf]
        %s1691 = scalar_lea.vmem %s1687, 32 [#allocation4]
        %v1692 = vld [vmem:[%s1691] ss:$2 sm:$0xf]
        %s1693 = scalar_lea.vmem %s1687, 48 [#allocation4]
        %v1694 = vld [vmem:[%s1693] ss:$2 sm:$0xf]
        %s1695 = scalar_lea.vmem %s1687, 1 [#allocation4]
        %v1696 = vld [vmem:[%s1695] ss:$2 sm:$0xf]
        %s1697 = scalar_lea.vmem %s1687, 17 [#allocation4]
        %v1698 = vld [vmem:[%s1697] ss:$2 sm:$0xf]
        %s1699 = scalar_lea.vmem %s1687, 33 [#allocation4]
        %v1700 = vld [vmem:[%s1699] ss:$2 sm:$0xf]
        %s1701 = scalar_lea.vmem %s1687, 49 [#allocation4]
        %v1702 = vld [vmem:[%s1701] ss:$2 sm:$0xf]
        %v1703 = vmax.f32 %v1688, %v1696
        %v1704 = vmax.f32 %v1690, %v1698
        %v1705 = vmax.f32 %v1692, %v1700
        %v1706 = vmax.f32 %v1694, %v1702
        %v1707 = vmax.f32 %v1683, %v1703
        %v1708 = vmax.f32 %v1684, %v1704
        %v1709 = vmax.f32 %v1685, %v1705
        %v1710 = vmax.f32 %v1686, %v1706
        %1711 = vst.msk [vmem:[#allocation5] sm:$0xff] %vm1201, 0.0
        %vm1712 = vcmask 517120
        %1713 = vst.msk [vmem:[#allocation5 + $0x8] sm:$0x3] %vm1712, 0.0
        %s1714 = scalar_lea.vmem [#allocation5], 80
        %1715 = vst.msk [vmem:[%s1714] sm:$0xff] %vm1201, 0.0
        %1716 = vst.msk [vmem:[%s1714 + $0x8] sm:$0x3] %vm1712, 0.0
        %vm1717 = vcmask 516096
        %1718 = vst.msk [vmem:[#allocation5] sm:$0x1] %vm1717, 0.0
        %1719 = vst.msk [vmem:[#allocation5 + $0x10] sm:$0x1] %vm1717, 0.0
        %1720 = vst.msk [vmem:[#allocation5 + $0x20] sm:$0x1] %vm1717, 0.0
        %1721 = vst.msk [vmem:[#allocation5 + $0x30] sm:$0x1] %vm1717, 0.0
        %1722 = vst.msk [vmem:[#allocation5 + $0x40] sm:$0x1] %vm1717, 0.0
        %1723 = vst.msk [vmem:[#allocation5 + $0x50] sm:$0x1] %vm1717, 0.0
        %vm1724 = vcmask 520192
        %1725 = vst.msk [vmem:[#allocation5 + $0x5] sm:$0x1f] %vm1724, 0.0
        %1726 = vst.msk [vmem:[#allocation5 + $0x15] sm:$0x1f] %vm1724, 0.0
        %1727 = vst.msk [vmem:[#allocation5 + $0x25] sm:$0x1f] %vm1724, 0.0
        %1728 = vst.msk [vmem:[#allocation5 + $0x35] sm:$0x1f] %vm1724, 0.0
        %1729 = vst.msk [vmem:[#allocation5 + $0x45] sm:$0x1f] %vm1724, 0.0
        %1730 = vst.msk [vmem:[#allocation5 + $0x55] sm:$0x1f] %vm1724, 0.0
        %s1731 = scalar_lea.vmem [#allocation5], 16
        %vm1732 = vcmask 519168
        %1733 = vst.msk [vmem:[%s1731 + $0x1] sm:$0xf] %vm1732, %v1707
        %1734 = vst.msk [vmem:[%s1731 + $0x11] sm:$0xf] %vm1732, %v1708
        %1735 = vst.msk [vmem:[%s1731 + $0x21] sm:$0xf] %vm1732, %v1709
        %1736 = vst.msk [vmem:[%s1731 + $0x31] sm:$0xf] %vm1732, %v1710
        %v1737 = vld [vmem:[#allocation5] sm:$0xff]
        %v1738 = vld [vmem:[#allocation5 + $0x10] sm:$0xff]
        %v1739 = vld [vmem:[#allocation5 + $0x20] sm:$0xff]
        %v1740 = vld [vmem:[#allocation5 + $0x30] sm:$0xff]
        %v1741 = vpack.c.bf16 %v1737, %v1737
        %v1742 = vpack.c.bf16 %v1738, %v1738
        %v1743 = vpack.c.bf16 %v1739, %v1739
        %v1744 = vpack.c.bf16 %v1740, %v1740
        %v1745 = vld [vmem:[#allocation5 + $0x1] sm:$0xff]
        %v1746 = vld [vmem:[#allocation5 + $0x11] sm:$0xff]
        %v1747 = vld [vmem:[#allocation5 + $0x21] sm:$0xff]
        %v1748 = vld [vmem:[#allocation5 + $0x31] sm:$0xff]
        %v1749 = vpack.c.bf16 %v1745, %v1745
        %v1750 = vpack.c.bf16 %v1746, %v1746
        %v1751 = vpack.c.bf16 %v1747, %v1747
        %v1752 = vpack.c.bf16 %v1748, %v1748
        %v1753 = vld [vmem:[#allocation5 + $0x2] sm:$0xff]
        %v1754 = vld [vmem:[#allocation5 + $0x12] sm:$0xff]
        %v1755 = vld [vmem:[#allocation5 + $0x22] sm:$0xff]
        %v1756 = vld [vmem:[#allocation5 + $0x32] sm:$0xff]
        %v1757 = vpack.c.bf16 %v1753, %v1753
        %v1758 = vpack.c.bf16 %v1754, %v1754
        %v1759 = vpack.c.bf16 %v1755, %v1755
        %v1760 = vpack.c.bf16 %v1756, %v1756
        %v1761 = vld [vmem:[%s1731] sm:$0xff]
        %v1762 = vld [vmem:[%s1731 + $0x10] sm:$0xff]
        %v1763 = vld [vmem:[%s1731 + $0x20] sm:$0xff]
        %v1764 = vld [vmem:[%s1731 + $0x30] sm:$0xff]
        %v1765 = vpack.c.bf16 %v1761, %v1761
        %v1766 = vpack.c.bf16 %v1762, %v1762
        %v1767 = vpack.c.bf16 %v1763, %v1763
        %v1768 = vpack.c.bf16 %v1764, %v1764
        %v1769 = vld [vmem:[%s1731 + $0x1] sm:$0xff]
        %v1770 = vld [vmem:[%s1731 + $0x11] sm:$0xff]
        %v1771 = vld [vmem:[%s1731 + $0x21] sm:$0xff]
        %v1772 = vld [vmem:[%s1731 + $0x31] sm:$0xff]
        %v1773 = vpack.c.bf16 %v1769, %v1769
        %v1774 = vpack.c.bf16 %v1770, %v1770
        %v1775 = vpack.c.bf16 %v1771, %v1771
        %v1776 = vpack.c.bf16 %v1772, %v1772
        %v1777 = vld [vmem:[%s1731 + $0x2] sm:$0xff]
        %v1778 = vld [vmem:[%s1731 + $0x12] sm:$0xff]
        %v1779 = vld [vmem:[%s1731 + $0x22] sm:$0xff]
        %v1780 = vld [vmem:[%s1731 + $0x32] sm:$0xff]
        %v1781 = vpack.c.bf16 %v1777, %v1777
        %v1782 = vpack.c.bf16 %v1778, %v1778
        %v1783 = vpack.c.bf16 %v1779, %v1779
        %v1784 = vpack.c.bf16 %v1780, %v1780
        %s1785 = scalar_lea.vmem [#allocation5], 32
        %v1786 = vld [vmem:[%s1785] sm:$0xff]
        %v1787 = vld [vmem:[%s1785 + $0x10] sm:$0xff]
        %v1788 = vld [vmem:[%s1785 + $0x20] sm:$0xff]
        %v1789 = vld [vmem:[%s1785 + $0x30] sm:$0xff]
        %v1790 = vpack.c.bf16 %v1786, %v1786
        %v1791 = vpack.c.bf16 %v1787, %v1787
        %v1792 = vpack.c.bf16 %v1788, %v1788
        %v1793 = vpack.c.bf16 %v1789, %v1789
        %v1794 = vld [vmem:[%s1785 + $0x1] sm:$0xff]
        %v1795 = vld [vmem:[%s1785 + $0x11] sm:$0xff]
        %v1796 = vld [vmem:[%s1785 + $0x21] sm:$0xff]
        %v1797 = vld [vmem:[%s1785 + $0x31] sm:$0xff]
        %v1798 = vpack.c.bf16 %v1794, %v1794
        %v1799 = vpack.c.bf16 %v1795, %v1795
        %v1800 = vpack.c.bf16 %v1796, %v1796
        %v1801 = vpack.c.bf16 %v1797, %v1797
        %v1802 = vld [vmem:[%s1785 + $0x2] sm:$0xff]
        %v1803 = vld [vmem:[%s1785 + $0x12] sm:$0xff]
        %v1804 = vld [vmem:[%s1785 + $0x22] sm:$0xff]
        %v1805 = vld [vmem:[%s1785 + $0x32] sm:$0xff]
        %v1806 = vpack.c.bf16 %v1802, %v1802
        %v1807 = vpack.c.bf16 %v1803, %v1803
        %v1808 = vpack.c.bf16 %v1804, %v1804
        %v1809 = vpack.c.bf16 %v1805, %v1805
        %1814 = vrot.lane.b32.xlu0 %v1749, 64
        %v1815 = vpop.permute.xlu0 %1814
        %1816 = vrot.lane.b32.xlu0 %v1750, 64
        %v1817 = vpop.permute.xlu0 %1816
        %1818 = vrot.lane.b32.xlu0 %v1751, 64
        %v1819 = vpop.permute.xlu0 %1818
        %1820 = vrot.lane.b32.xlu0 %v1752, 64
        %v1821 = vpop.permute.xlu0 %1820
        %1826 = vrot.lane.b32.xlu0 %v1765, 64
        %v1827 = vpop.permute.xlu0 %1826
        %1828 = vrot.lane.b32.xlu0 %v1766, 64
        %v1829 = vpop.permute.xlu0 %1828
        %1830 = vrot.lane.b32.xlu0 %v1767, 64
        %v1831 = vpop.permute.xlu0 %1830
        %1832 = vrot.lane.b32.xlu0 %v1768, 64
        %v1833 = vpop.permute.xlu0 %1832
        %1838 = vrot.lane.b32.xlu0 %v1781, 64
        %v1839 = vpop.permute.xlu0 %1838
        %1840 = vrot.lane.b32.xlu0 %v1782, 64
        %v1841 = vpop.permute.xlu0 %1840
        %1842 = vrot.lane.b32.xlu0 %v1783, 64
        %v1843 = vpop.permute.xlu0 %1842
        %1844 = vrot.lane.b32.xlu0 %v1784, 64
        %v1845 = vpop.permute.xlu0 %1844
        %1850 = vrot.lane.b32.xlu0 %v1798, 64
        %v1851 = vpop.permute.xlu0 %1850
        %1852 = vrot.lane.b32.xlu0 %v1799, 64
        %v1853 = vpop.permute.xlu0 %1852
        %1854 = vrot.lane.b32.xlu0 %v1800, 64
        %v1855 = vpop.permute.xlu0 %1854
        %1856 = vrot.lane.b32.xlu0 %v1801, 64
        %v1857 = vpop.permute.xlu0 %1856
        %v1860 = vsel %vm1201, %v1741, %v1815
        %v1863 = vsel %vm1201, %v1742, %v1817
        %v1866 = vsel %vm1201, %v1743, %v1819
        %v1869 = vsel %vm1201, %v1744, %v1821
        %v1872 = vsel %vm1201, %v1757, %v1827
        %v1875 = vsel %vm1201, %v1758, %v1829
        %v1878 = vsel %vm1201, %v1759, %v1831
        %v1881 = vsel %vm1201, %v1760, %v1833
        %v1884 = vsel %vm1201, %v1773, %v1839
        %v1887 = vsel %vm1201, %v1774, %v1841
        %v1890 = vsel %vm1201, %v1775, %v1843
        %v1893 = vsel %vm1201, %v1776, %v1845
        %v1896 = vsel %vm1201, %v1790, %v1851
        %v1899 = vsel %vm1201, %v1791, %v1853
        %v1902 = vsel %vm1201, %v1792, %v1855
        %v1905 = vsel %vm1201, %v1793, %v1857
        %v1926 = vunpack.c.l.b16 %v1860
        %v1927 = vunpack.c.l.b16 %v1872
        %v1928 = vunpack.c.l.b16 %v1884
        %v1929 = vunpack.c.l.b16 %v1896
        %v1930 = vunpack.c.l.b16 %v1806
        %v1931 = vunpack.c.l.b16 %v1863
        %v1932 = vunpack.c.l.b16 %v1875
        %v1933 = vunpack.c.l.b16 %v1887
        %v1934 = vunpack.c.l.b16 %v1899
        %v1935 = vunpack.c.l.b16 %v1807
        %v1936 = vunpack.c.l.b16 %v1866
        %v1937 = vunpack.c.l.b16 %v1878
        %v1938 = vunpack.c.l.b16 %v1890
        %v1939 = vunpack.c.l.b16 %v1902
        %v1940 = vunpack.c.l.b16 %v1808
        %v1941 = vunpack.c.l.b16 %v1869
        %v1942 = vunpack.c.l.b16 %v1881
        %v1943 = vunpack.c.l.b16 %v1893
        %v1944 = vunpack.c.l.b16 %v1905
        %v1945 = vunpack.c.l.b16 %v1809
        %v1946 = vld [vmem:[%s5] sm:$0xf]
        %v1947 = vld [vmem:[%s5 + $0x4] sm:$0xf]
        %v1948 = vld [vmem:[%s5 + $0x8] sm:$0xf]
        %v1949 = vld [vmem:[%s5 + $0xc] sm:$0xf]
        %v1950 = vld [vmem:[%s5 + $0x10] sm:$0xf]
        %v1951 = vld [vmem:[%s5 + $0x14] sm:$0xf]
        %v1952 = vld [vmem:[%s5 + $0x18] sm:$0xf]
        %v1953 = vld [vmem:[%s5 + $0x1c] sm:$0xf]
        %v1954 = vld [vmem:[%s5 + $0x20] sm:$0xf]
        %v1955 = vld [vmem:[%s5 + $0x24] sm:$0xf]
        %v1956 = vld [vmem:[%s5 + $0x28] sm:$0xf]
        %v1957 = vld [vmem:[%s5 + $0x2c] sm:$0xf]
        %v1958 = vld [vmem:[%s5 + $0x30] sm:$0xf]
        %v1959 = vld [vmem:[%s5 + $0x34] sm:$0xf]
        %v1960 = vld [vmem:[%s5 + $0x38] sm:$0xf]
        %v1961 = vld [vmem:[%s5 + $0x3c] sm:$0xf]
        %v1962 = vld [vmem:[%s5 + $0x40] sm:$0xf]
        %v1963 = vld [vmem:[%s5 + $0x44] sm:$0xf]
        %v1964 = vld [vmem:[%s5 + $0x48] sm:$0xf]
        %v1965 = vld [vmem:[%s5 + $0x4c] sm:$0xf]
        %v1966 = vld [vmem:[%s5 + $0x50] sm:$0xf]
        %v1967 = vld [vmem:[%s5 + $0x54] sm:$0xf]
        %v1968 = vld [vmem:[%s5 + $0x58] sm:$0xf]
        %v1969 = vld [vmem:[%s5 + $0x5c] sm:$0xf]
        %v1970 = vld [vmem:[%s5 + $0x60] sm:$0xf]
        %v1971 = vld [vmem:[%s5 + $0x64] sm:$0xf]
        %v1972 = vld [vmem:[%s5 + $0x68] sm:$0xf]
        %v1973 = vld [vmem:[%s5 + $0x6c] sm:$0xf]
        %v1974 = vld [vmem:[%s5 + $0x70] sm:$0xf]
        %v1975 = vld [vmem:[%s5 + $0x74] sm:$0xf]
        %v1976 = vld [vmem:[%s5 + $0x78] sm:$0xf]
        %v1977 = vld [vmem:[%s5 + $0x7c] sm:$0xf]
        %v1978 = vld [vmem:[%s5 + $0x80] sm:$0xf]
        %v1979 = vld [vmem:[%s5 + $0x84] sm:$0xf]
        %v1980 = vld [vmem:[%s5 + $0x88] sm:$0xf]
        %v1981 = vld [vmem:[%s5 + $0x8c] sm:$0xf]
        %v1982 = vld [vmem:[%s5 + $0x90] sm:$0xf]
        %v1983 = vld [vmem:[%s5 + $0x94] sm:$0xf]
        %v1984 = vld [vmem:[%s5 + $0x98] sm:$0xf]
        %v1985 = vld [vmem:[%s5 + $0x9c] sm:$0xf]
        %v1986 = vld [vmem:[%s5 + $0xa0] sm:$0xf]
        %v1987 = vld [vmem:[%s5 + $0xa4] sm:$0xf]
        %v1988 = vld [vmem:[%s5 + $0xa8] sm:$0xf]
        %v1989 = vld [vmem:[%s5 + $0xac] sm:$0xf]
        %v1990 = vld [vmem:[%s5 + $0xb0] sm:$0xf]
        %v1991 = vld [vmem:[%s5 + $0xb4] sm:$0xf]
        %v1992 = vld [vmem:[%s5 + $0xb8] sm:$0xf]
        %v1993 = vld [vmem:[%s5 + $0xbc] sm:$0xf]
        %v1994 = vld [vmem:[%s5 + $0xc0] sm:$0xf]
        %v1995 = vld [vmem:[%s5 + $0xc4] sm:$0xf]
        %v1996 = vld [vmem:[%s5 + $0xc8] sm:$0xf]
        %v1997 = vld [vmem:[%s5 + $0xcc] sm:$0xf]
        %v1998 = vld [vmem:[%s5 + $0xd0] sm:$0xf]
        %v1999 = vld [vmem:[%s5 + $0xd4] sm:$0xf]
        %v2000 = vld [vmem:[%s5 + $0xd8] sm:$0xf]
        %v2001 = vld [vmem:[%s5 + $0xdc] sm:$0xf]
        %v2002 = vld [vmem:[%s5 + $0xe0] sm:$0xf]
        %v2003 = vld [vmem:[%s5 + $0xe4] sm:$0xf]
        %v2004 = vld [vmem:[%s5 + $0xe8] sm:$0xf]
        %v2005 = vld [vmem:[%s5 + $0xec] sm:$0xf]
        %v2006 = vld [vmem:[%s5 + $0xf0] sm:$0xf]
        %v2007 = vld [vmem:[%s5 + $0xf4] sm:$0xf]
        %v2008 = vld [vmem:[%s5 + $0xf8] sm:$0xf]
        %v2009 = vld [vmem:[%s5 + $0xfc] sm:$0xf]
        %v2010 = vld [vmem:[%s5 + $0x100] sm:$0xf]
        %v2011 = vld [vmem:[%s5 + $0x104] sm:$0xf]
        %v2012 = vld [vmem:[%s5 + $0x108] sm:$0xf]
        %v2013 = vld [vmem:[%s5 + $0x10c] sm:$0xf]
        %v2014 = vld [vmem:[%s5 + $0x110] sm:$0xf]
        %v2015 = vld [vmem:[%s5 + $0x114] sm:$0xf]
        %v2016 = vld [vmem:[%s5 + $0x118] sm:$0xf]
        %v2017 = vld [vmem:[%s5 + $0x11c] sm:$0xf]
        %v2018 = vld [vmem:[%s6] sm:$0x1]
        %v2020 = vlaneseq
        %v2021 = vshrl.u32 %v2020, 7
        %v2022 = vsub.s32 0, %v2021
        %v2023 = vrot.slane %v2018, %v2022
        %v2025 = vpack.c.b16 %v1931, %v1926
        %v2026 = vpack.c.b16 %v1932, %v1927
        %v2027 = vpack.c.b16 %v1933, %v1928
        %v2028 = vpack.c.b16 %v1934, %v1929
        %v2029 = vpack.c.b16 %v1935, %v1930
        %v2030 = vpack.c.b16 %v1941, %v1936
        %v2031 = vpack.c.b16 %v1942, %v1937
        %v2032 = vpack.c.b16 %v1943, %v1938
        %v2033 = vpack.c.b16 %v1944, %v1939
        %v2034 = vpack.c.b16 %v1945, %v1940
        %v2115 = vunpack.c.l.b16 %v1946
        %v2116 = vunpack.c.l.b16 %v1947
        %v2117 = vunpack.c.l.b16 %v1948
        %v2118 = vunpack.c.l.b16 %v1949
        %v2119 = vunpack.c.l.b16 %v1950
        %v2120 = vunpack.c.l.b16 %v1951
        %v2121 = vunpack.c.l.b16 %v1952
        %v2122 = vunpack.c.l.b16 %v1953
        %v2123 = vunpack.c.l.b16 %v1954
        %v2124 = vunpack.c.l.b16 %v1955
        %v2125 = vunpack.c.l.b16 %v1956
        %v2126 = vunpack.c.l.b16 %v1957
        %v2127 = vunpack.c.l.b16 %v1958
        %v2128 = vunpack.c.l.b16 %v1959
        %v2129 = vunpack.c.l.b16 %v1960
        %v2130 = vunpack.c.l.b16 %v1961
        %v2131 = vunpack.c.l.b16 %v1962
        %v2132 = vunpack.c.l.b16 %v1963
        %v2133 = vunpack.c.l.b16 %v1964
        %v2134 = vunpack.c.l.b16 %v1965
        %v2135 = vunpack.c.l.b16 %v1966
        %v2136 = vunpack.c.l.b16 %v1967
        %v2137 = vunpack.c.l.b16 %v1968
        %v2138 = vunpack.c.l.b16 %v1969
        %v2139 = vunpack.c.l.b16 %v1970
        %v2140 = vunpack.c.l.b16 %v1971
        %v2141 = vunpack.c.l.b16 %v1972
        %v2142 = vunpack.c.l.b16 %v1973
        %v2143 = vunpack.c.l.b16 %v1974
        %v2144 = vunpack.c.l.b16 %v1975
        %v2145 = vunpack.c.l.b16 %v1976
        %v2146 = vunpack.c.l.b16 %v1977
        %v2147 = vunpack.c.l.b16 %v1978
        %v2148 = vunpack.c.l.b16 %v1979
        %v2149 = vunpack.c.l.b16 %v1980
        %v2150 = vunpack.c.l.b16 %v1981
        %v2151 = vunpack.c.l.b16 %v1982
        %v2152 = vunpack.c.l.b16 %v1983
        %v2153 = vunpack.c.l.b16 %v1984
        %v2154 = vunpack.c.l.b16 %v1985
        %v2155 = vunpack.c.l.b16 %v1986
        %v2156 = vunpack.c.l.b16 %v1987
        %v2157 = vunpack.c.l.b16 %v1988
        %v2158 = vunpack.c.l.b16 %v1989
        %v2159 = vunpack.c.l.b16 %v1990
        %v2160 = vunpack.c.l.b16 %v1991
        %v2161 = vunpack.c.l.b16 %v1992
        %v2162 = vunpack.c.l.b16 %v1993
        %v2163 = vunpack.c.l.b16 %v1994
        %v2164 = vunpack.c.l.b16 %v1995
        %v2165 = vunpack.c.l.b16 %v1996
        %v2166 = vunpack.c.l.b16 %v1997
        %v2167 = vunpack.c.l.b16 %v1998
        %v2168 = vunpack.c.l.b16 %v1999
        %v2169 = vunpack.c.l.b16 %v2000
        %v2170 = vunpack.c.l.b16 %v2001
        %v2171 = vunpack.c.l.b16 %v2002
        %v2172 = vunpack.c.l.b16 %v2003
        %v2173 = vunpack.c.l.b16 %v2004
        %v2174 = vunpack.c.l.b16 %v2005
        %v2175 = vunpack.c.l.b16 %v2006
        %v2176 = vunpack.c.l.b16 %v2007
        %v2177 = vunpack.c.l.b16 %v2008
        %v2178 = vunpack.c.l.b16 %v2009
        %v2179 = vunpack.c.l.b16 %v2010
        %v2180 = vunpack.c.l.b16 %v2011
        %v2181 = vunpack.c.l.b16 %v2012
        %v2182 = vunpack.c.l.b16 %v2013
        %v2183 = vunpack.c.l.b16 %v2014
        %v2184 = vunpack.c.l.b16 %v2015
        %v2185 = vunpack.c.l.b16 %v2016
        %v2186 = vunpack.c.l.b16 %v2017
        %v2187 = vpack.c.b16 %v2116, %v2115
        %v2188 = vpack.c.b16 %v2118, %v2117
        %v2189 = vpack.c.b16 %v2120, %v2119
        %v2190 = vpack.c.b16 %v2122, %v2121
        %v2191 = vpack.c.b16 %v2124, %v2123
        %v2192 = vpack.c.b16 %v2126, %v2125
        %v2193 = vpack.c.b16 %v2128, %v2127
        %v2194 = vpack.c.b16 %v2130, %v2129
        %v2195 = vpack.c.b16 %v2132, %v2131
        %v2196 = vpack.c.b16 %v2134, %v2133
        %v2197 = vpack.c.b16 %v2136, %v2135
        %v2198 = vpack.c.b16 %v2138, %v2137
        %v2199 = vpack.c.b16 %v2140, %v2139
        %v2200 = vpack.c.b16 %v2142, %v2141
        %v2201 = vpack.c.b16 %v2144, %v2143
        %v2202 = vpack.c.b16 %v2146, %v2145
        %v2203 = vpack.c.b16 %v2148, %v2147
        %v2204 = vpack.c.b16 %v2150, %v2149
        %v2205 = vpack.c.b16 %v2152, %v2151
        %v2206 = vpack.c.b16 %v2154, %v2153
        %v2207 = vpack.c.b16 %v2156, %v2155
        %v2208 = vpack.c.b16 %v2158, %v2157
        %v2209 = vpack.c.b16 %v2160, %v2159
        %v2210 = vpack.c.b16 %v2162, %v2161
        %v2211 = vpack.c.b16 %v2164, %v2163
        %v2212 = vpack.c.b16 %v2166, %v2165
        %v2213 = vpack.c.b16 %v2168, %v2167
        %v2214 = vpack.c.b16 %v2170, %v2169
        %v2215 = vpack.c.b16 %v2172, %v2171
        %v2216 = vpack.c.b16 %v2174, %v2173
        %v2217 = vpack.c.b16 %v2176, %v2175
        %v2218 = vpack.c.b16 %v2178, %v2177
        %v2219 = vpack.c.b16 %v2180, %v2179
        %v2220 = vpack.c.b16 %v2182, %v2181
        %v2221 = vpack.c.b16 %v2184, %v2183
        %v2222 = vpack.c.b16 %v2186, %v2185
        %v2260 = vsel %vm1201, %v2029, 0
        %v2263 = vsel %vm1201, %v2034, 0
        %2265 = vmatprep.subr.bf16.mxu0 0
        %2266 = vmatpush1.bf16.msra.mxu0 %v2187
        %2267 = vmatprep.subr.bf16.mxu0 0
        %2268 = vmatpush1.bf16.msra.mxu0 %v2188
        %2269 = vmatprep.subr.bf16.mxu0 0
        %2270 = vmatpush1.bf16.msra.mxu0 %v2189
        %2271 = vmatprep.subr.bf16.mxu0 0
        %2272 = vmatpush1.bf16.msra.mxu0 %v2190
        %2273 = vmatprep.subr.bf16.mxu0 0
        %2274 = vmatpush1.bf16.msra.mxu0 %v2191
        %2275 = vmatprep.subr.bf16.mxu0 0
        %2276 = vmatpush1.bf16.msra.mxu0 %v2192
        %2277 = vmatprep.subr.bf16.mxu0 0
        %2278 = vmatpush1.bf16.msra.mxu0 %v2193
        %2279 = vmatprep.subr.bf16.mxu0 0
        %2280 = vmatpush1.bf16.msra.mxu0 %v2194
        %2281 = vmatprep.subr.bf16.mxu0 0
        %2282 = vmatpush1.bf16.msra.mxu0 %v2195
        %2283 = vmatprep.subr.bf16.mxu0 0
        %2284 = vmatpush1.bf16.msra.mxu0 %v2196
        %2285 = vmatprep.subr.bf16.mxu0 0
        %2286 = vmatpush1.bf16.msra.mxu0 %v2197
        %2287 = vmatprep.subr.bf16.mxu0 0
        %2288 = vmatpush1.bf16.msra.mxu0 %v2198
        %2289 = vmatprep.subr.bf16.mxu0 0
        %2290 = vmatpush1.bf16.msra.mxu0 %v2199
        %2291 = vmatprep.subr.bf16.mxu0 0
        %2292 = vmatpush1.bf16.msra.mxu0 %v2200
        %2293 = vmatprep.subr.bf16.mxu0 0
        %2294 = vmatpush1.bf16.msra.mxu0 %v2201
        %2295 = vmatprep.subr.bf16.mxu0 0
        %2296 = vmatpush1.bf16.msra.mxu0 %v2202
        %2297 = vmatprep.mubr.bf16.mxu0 %v2026
        %2298 = vmatmul.mubr.bf16.gmra.mrb[0].mxu0 %v2025
        %v2299 = vpop.f32.mrb[0].mxu0
        %v2300 = vadd.f32 %v2023, %v2299
        %v2301 = vpop.f32.mrb[0].mxu0
        %v2302 = vpop.f32.mrb[0].mxu0
        %v2303 = vadd.f32 %v2023, %v2302
        %v2304 = vpop.f32.mrb[0].mxu0
        %2305 = vmatprep.mubr.bf16.mxu0 %v2031
        %2306 = vmatmul.mubr.bf16.gmra.mrb[0].mxu0 %v2030
        %v2307 = vpop.f32.mrb[0].mxu0
        %v2308 = vadd.f32 %v2023, %v2307
        %v2309 = vpop.f32.mrb[0].mxu0
        %v2310 = vpop.f32.mrb[0].mxu0
        %v2311 = vadd.f32 %v2023, %v2310
        %v2312 = vpop.f32.mrb[0].mxu0
        %2313 = vdwg.mxu0
        %2314 = vmatprep.subr.bf16.mxu0 0
        %2315 = vmatpush1.bf16.msra.mxu0 %v2203
        %2316 = vmatprep.subr.bf16.mxu0 0
        %2317 = vmatpush1.bf16.msra.mxu0 %v2204
        %2318 = vmatprep.subr.bf16.mxu0 0
        %2319 = vmatpush1.bf16.msra.mxu0 %v2205
        %2320 = vmatprep.subr.bf16.mxu0 0
        %2321 = vmatpush1.bf16.msra.mxu0 %v2206
        %2322 = vmatprep.subr.bf16.mxu0 0
        %2323 = vmatpush1.bf16.msra.mxu0 %v2207
        %2324 = vmatprep.subr.bf16.mxu0 0
        %2325 = vmatpush1.bf16.msra.mxu0 %v2208
        %2326 = vmatprep.subr.bf16.mxu0 0
        %2327 = vmatpush1.bf16.msra.mxu0 %v2209
        %2328 = vmatprep.subr.bf16.mxu0 0
        %2329 = vmatpush1.bf16.msra.mxu0 %v2210
        %2330 = vmatprep.subr.bf16.mxu0 0
        %2331 = vmatpush1.bf16.msra.mxu0 %v2211
        %2332 = vmatprep.subr.bf16.mxu0 0
        %2333 = vmatpush1.bf16.msra.mxu0 %v2212
        %2334 = vmatprep.subr.bf16.mxu0 0
        %2335 = vmatpush1.bf16.msra.mxu0 %v2213
        %2336 = vmatprep.subr.bf16.mxu0 0
        %2337 = vmatpush1.bf16.msra.mxu0 %v2214
        %2338 = vmatprep.subr.bf16.mxu0 0
        %2339 = vmatpush1.bf16.msra.mxu0 %v2215
        %2340 = vmatprep.subr.bf16.mxu0 0
        %2341 = vmatpush1.bf16.msra.mxu0 %v2216
        %2342 = vmatprep.subr.bf16.mxu0 0
        %2343 = vmatpush1.bf16.msra.mxu0 %v2217
        %2344 = vmatprep.subr.bf16.mxu0 0
        %2345 = vmatpush1.bf16.msra.mxu0 %v2218
        %2346 = vmatprep.mubr.bf16.mxu0 %v2028
        %2347 = vmatmul.mubr.bf16.gmra.mrb[0].mxu0 %v2027
        %v2348 = vpop.f32.mrb[0].mxu0
        %v2349 = vadd.f32 %v2300, %v2348
        %v2350 = vpop.f32.mrb[0].mxu0
        %v2351 = vpop.f32.mrb[0].mxu0
        %v2352 = vadd.f32 %v2303, %v2351
        %v2353 = vpop.f32.mrb[0].mxu0
        %2354 = vmatprep.mubr.bf16.mxu0 %v2033
        %2355 = vmatmul.mubr.bf16.gmra.mrb[0].mxu0 %v2032
        %v2356 = vpop.f32.mrb[0].mxu0
        %v2357 = vadd.f32 %v2308, %v2356
        %v2358 = vpop.f32.mrb[0].mxu0
        %v2359 = vpop.f32.mrb[0].mxu0
        %v2360 = vadd.f32 %v2311, %v2359
        %v2361 = vpop.f32.mrb[0].mxu0
        %2362 = vdwg.mxu0
        %2363 = vmatprep.subr.bf16.mxu0 0
        %2364 = vmatpush1.bf16.msra.mxu0 %v2219
        %2365 = vmatprep.subr.bf16.mxu0 0
        %2366 = vmatpush1.bf16.msra.mxu0 %v2220
        %2367 = vmatprep.subr.bf16.mxu0 0
        %2368 = vmatpush1.bf16.msra.mxu0 %v2221
        %2369 = vmatprep.subr.bf16.mxu0 0
        %2370 = vmatpush1.bf16.msra.mxu0 %v2222
        %2371 = vmatprep.subr.bf16.mxu0 0
        %2372 = vmatpush1.bf16.msra.mxu0 0
        %2373 = vmatprep.subr.bf16.mxu0 0
        %2374 = vmatpush1.bf16.msra.mxu0 0
        %2375 = vmatprep.subr.bf16.mxu0 0
        %2376 = vmatpush1.bf16.msra.mxu0 0
        %2377 = vmatprep.subr.bf16.mxu0 0
        %2378 = vmatpush1.bf16.msra.mxu0 0
        %2379 = vmatprep.subr.bf16.mxu0 0
        %2380 = vmatpush1.bf16.msra.mxu0 0
        %2381 = vmatprep.subr.bf16.mxu0 0
        %2382 = vmatpush1.bf16.msra.mxu0 0
        %2383 = vmatprep.subr.bf16.mxu0 0
        %2384 = vmatpush1.bf16.msra.mxu0 0
        %2385 = vmatprep.subr.bf16.mxu0 0
        %2386 = vmatpush1.bf16.msra.mxu0 0
        %2387 = vmatprep.subr.bf16.mxu0 0
        %2388 = vmatpush1.bf16.msra.mxu0 0
        %2389 = vmatprep.subr.bf16.mxu0 0
        %2390 = vmatpush1.bf16.msra.mxu0 0
        %2391 = vmatprep.subr.bf16.mxu0 0
        %2392 = vmatpush1.bf16.msra.mxu0 0
        %2393 = vmatprep.subr.bf16.mxu0 0
        %2394 = vmatpush1.bf16.msra.mxu0 0
        %2395 = vmatprep.mubr.bf16.mxu0 0
        %2396 = vmatmul.mubr.bf16.gmra.mrb[0].mxu0 %v2260
        %v2397 = vpop.f32.mrb[0].mxu0
        %v2398 = vadd.f32 %v2349, %v2397
        %v2399 = vpop.f32.mrb[0].mxu0
        %v2400 = vpop.f32.mrb[0].mxu0
        %v2401 = vadd.f32 %v2352, %v2400
        %v2402 = vpop.f32.mrb[0].mxu0
        %2403 = vmatprep.mubr.bf16.mxu0 0
        %2404 = vmatmul.mubr.bf16.gmra.mrb[0].mxu0 %v2263
        %v2405 = vpop.f32.mrb[0].mxu0
        %v2406 = vadd.f32 %v2357, %v2405
        %v2407 = vpop.f32.mrb[0].mxu0
        %v2408 = vpop.f32.mrb[0].mxu0
        %v2409 = vadd.f32 %v2360, %v2408
        %v2410 = vpop.f32.mrb[0].mxu0
        %2411 = vdwg.mxu0
        %v2412 = vmax.f32 %v2398, 0.0
        %v2413 = vmax.f32 %v2401, 0.0
        %v2414 = vmax.f32 %v2406, 0.0
        %v2415 = vmax.f32 %v2409, 0.0
        %v2416 = vlaneseq
        %v2417 = vshrl.u32 %v2416, 7
        %v2418 = vadd.s32 %v2417, 8
        %v2419 = vadd.s32 %v2417, 16
        %v2420 = vadd.s32 %v2417, 24
        %vm2421 = vcmp.lt.s32.totalorder %v2417, 0
        %v2422 = vsub.s32 0, %v2417
        %v2423 = vsel %vm2421, %v2422, %v2417
        %v2424 = vshrl.u32 %v2423, 3
        %v2425 = vand.u32 %v2423, 7
        %v2426 = vsub.s32 0, %v2425
        %v2427 = vsel %vm2421, %v2426, %v2425
        %vm2428 = vcmp.lt.s32.totalorder %v2418, 0
        %v2429 = vsub.s32 0, %v2418
        %v2430 = vsel %vm2428, %v2429, %v2418
        %v2431 = vshrl.u32 %v2430, 3
        %v2432 = vand.u32 %v2430, 7
        %v2433 = vsub.s32 0, %v2432
        %v2434 = vsel %vm2428, %v2433, %v2432
        %vm2435 = vcmp.lt.s32.totalorder %v2419, 0
        %v2436 = vsub.s32 0, %v2419
        %v2437 = vsel %vm2435, %v2436, %v2419
        %v2438 = vshrl.u32 %v2437, 3
        %v2439 = vand.u32 %v2437, 7
        %v2440 = vsub.s32 0, %v2439
        %v2441 = vsel %vm2435, %v2440, %v2439
        %vm2442 = vcmp.lt.s32.totalorder %v2420, 0
        %v2443 = vsub.s32 0, %v2420
        %v2444 = vsel %vm2442, %v2443, %v2420
        %v2445 = vshrl.u32 %v2444, 3
        %v2446 = vand.u32 %v2444, 7
        %v2447 = vsub.s32 0, %v2446
        %v2448 = vsel %vm2442, %v2447, %v2446
        %vm2449 = vcmp.ne.s32.totalorder %v2427, 0
        %vm2450 = vcmp.ne.s32.totalorder %v2434, 0
        %vm2451 = vcmp.ne.s32.totalorder %v2441, 0
        %vm2452 = vcmp.ne.s32.totalorder %v2448, 0
        %vm2453 = vcmp.lt.s32.totalorder %v2427, 0
        %vm2454 = vcmp.lt.s32.totalorder %v2434, 0
        %vm2455 = vcmp.lt.s32.totalorder %v2441, 0
        %vm2456 = vcmp.lt.s32.totalorder %v2448, 0
        %vm2457 = vmand %vm2453, %vm2449
        %vm2458 = vmand %vm2454, %vm2450
        %vm2459 = vmand %vm2455, %vm2451
        %vm2460 = vmand %vm2456, %vm2452
        %v2461 = vadd.s32 %v2427, 8
        %v2462 = vadd.s32 %v2434, 8
        %v2463 = vadd.s32 %v2441, 8
        %v2464 = vadd.s32 %v2448, 8
        %v2465 = vsel %vm2457, %v2461, %v2427
        %v2466 = vsel %vm2458, %v2462, %v2434
        %v2467 = vsel %vm2459, %v2463, %v2441
        %v2468 = vsel %vm2460, %v2464, %v2448
        %vm2469 = vcmp.lt.s32.totalorder %v2465, 4
        %vm2470 = vcmp.lt.s32.totalorder %v2466, 4
        %vm2471 = vcmp.lt.s32.totalorder %v2467, 4
        %vm2472 = vcmp.lt.s32.totalorder %v2468, 4
        %v2473 = vsel %vm2469, %v2412, 0.0
        %v2474 = vsel %vm2470, %v2413, 0.0
        %v2475 = vsel %vm2471, %v2414, 0.0
        %v2476 = vsel %vm2472, %v2415, 0.0
        %v2477 = vadd.f32 %v2473, %v2474
        %v2478 = vadd.f32 %v2477, %v2475
        %v2479 = vadd.f32 %v2478, %v2476
        %v2480 = vrot.slane %v2479, 4
        %v2481 = vadd.f32 %v2479, %v2480
        %v2482 = vrot.slane %v2481, 2
        %v2483 = vadd.f32 %v2481, %v2482
        %v2484 = vrot.slane %v2483, 1
        %v2485 = vadd.f32 %v2483, %v2484
        %v2486 = vmul.f32 %v2485, 0.0625
        %v2487 = vpack.c.bf16 %v2486, %v2486
        %v2488 = vld [vmem:[%s7] sm:$0xf]
        %v2489 = vld [vmem:[%s7 + $0x4] sm:$0xf]
        %v2490 = vld [vmem:[%s7 + $0x8] sm:$0xf]
        %v2491 = vld [vmem:[%s7 + $0xc] sm:$0xf]
        %v2492 = vld [vmem:[%s7 + $0x10] sm:$0xf]
        %v2493 = vld [vmem:[%s7 + $0x14] sm:$0xf]
        %v2494 = vld [vmem:[%s7 + $0x18] sm:$0xf]
        %v2495 = vld [vmem:[%s7 + $0x1c] sm:$0xf]
        %v2496 = vld [vmem:[%s7 + $0x20] sm:$0xf]
        %v2497 = vld [vmem:[%s7 + $0x24] sm:$0xf]
        %v2498 = vld [vmem:[%s7 + $0x28] sm:$0xf]
        %v2499 = vld [vmem:[%s7 + $0x2c] sm:$0xf]
        %v2500 = vld [vmem:[%s7 + $0x30] sm:$0xf]
        %v2501 = vld [vmem:[%s7 + $0x34] sm:$0xf]
        %v2502 = vld [vmem:[%s7 + $0x38] sm:$0xf]
        %v2503 = vld [vmem:[%s7 + $0x3c] sm:$0xf]
        %v2504 = vld [vmem:[%s8] sm:$0x1]
        %v2521 = vunpack.c.l.b16 %v2488
        %v2522 = vunpack.c.l.b16 %v2489
        %v2523 = vunpack.c.l.b16 %v2490
        %v2524 = vunpack.c.l.b16 %v2491
        %v2525 = vunpack.c.l.b16 %v2492
        %v2526 = vunpack.c.l.b16 %v2493
        %v2527 = vunpack.c.l.b16 %v2494
        %v2528 = vunpack.c.l.b16 %v2495
        %v2529 = vunpack.c.l.b16 %v2496
        %v2530 = vunpack.c.l.b16 %v2497
        %v2531 = vunpack.c.l.b16 %v2498
        %v2532 = vunpack.c.l.b16 %v2499
        %v2533 = vunpack.c.l.b16 %v2500
        %v2534 = vunpack.c.l.b16 %v2501
        %v2535 = vunpack.c.l.b16 %v2502
        %v2536 = vunpack.c.l.b16 %v2503
        %v2537 = vpack.c.b16 %v2522, %v2521
        %v2538 = vpack.c.b16 %v2524, %v2523
        %v2539 = vpack.c.b16 %v2526, %v2525
        %v2540 = vpack.c.b16 %v2528, %v2527
        %v2541 = vpack.c.b16 %v2530, %v2529
        %v2542 = vpack.c.b16 %v2532, %v2531
        %v2543 = vpack.c.b16 %v2534, %v2533
        %v2544 = vpack.c.b16 %v2536, %v2535
        %2553 = vmatprep.subr.bf16.mxu0 0
        %2554 = vmatpush1.bf16.msra.mxu0 %v2537
        %2555 = vmatprep.subr.bf16.mxu0 0
        %2556 = vmatpush1.bf16.msra.mxu0 %v2538
        %2557 = vmatprep.subr.bf16.mxu0 0
        %2558 = vmatpush1.bf16.msra.mxu0 %v2539
        %2559 = vmatprep.subr.bf16.mxu0 0
        %2560 = vmatpush1.bf16.msra.mxu0 %v2540
        %2561 = vmatprep.subr.bf16.mxu0 0
        %2562 = vmatpush1.bf16.msra.mxu0 %v2541
        %2563 = vmatprep.subr.bf16.mxu0 0
        %2564 = vmatpush1.bf16.msra.mxu0 %v2542
        %2565 = vmatprep.subr.bf16.mxu0 0
        %2566 = vmatpush1.bf16.msra.mxu0 %v2543
        %2567 = vmatprep.subr.bf16.mxu0 0
        %2568 = vmatpush1.bf16.msra.mxu0 %v2544
        %2569 = vmatprep.subr.bf16.mxu0 0
        %2570 = vmatpush1.bf16.msra.mxu0 0
        %2571 = vmatprep.subr.bf16.mxu0 0
        %2572 = vmatpush1.bf16.msra.mxu0 0
        %2573 = vmatprep.subr.bf16.mxu0 0
        %2574 = vmatpush1.bf16.msra.mxu0 0
        %2575 = vmatprep.subr.bf16.mxu0 0
        %2576 = vmatpush1.bf16.msra.mxu0 0
        %2577 = vmatprep.subr.bf16.mxu0 0
        %2578 = vmatpush1.bf16.msra.mxu0 0
        %2579 = vmatprep.subr.bf16.mxu0 0
        %2580 = vmatpush1.bf16.msra.mxu0 0
        %2581 = vmatprep.subr.bf16.mxu0 0
        %2582 = vmatpush1.bf16.msra.mxu0 0
        %2583 = vmatprep.subr.bf16.mxu0 0
        %2584 = vmatpush1.bf16.msra.mxu0 0
        %2585 = vmatprep.mubr.bf16.mxu0 0
        %2586 = vmatmul.mubr.bf16.gmra.mrb[0].mxu0 %v2487
        %v2587 = vpop.f32.mrb[0].mxu0
        %v2588 = vadd.f32 %v2504, %v2587
        %v2589 = vpop.f32.mrb[0].mxu0
        %v2590 = vpop.f32.mrb[0].mxu0
        %v2591 = vpop.f32.mrb[0].mxu0
        %2592 = vdwg.mxu0
        %2593 = vst [vmem:[%s324] sm:$0x1] %v2588
        %s2594 = sand.u32 %s225, 1
        %s2595 = scalar_lea.sflag [#allocation7], %s2594
        %s2596 = sand.u32 %s225, 1
        %s2597 = scalar_lea.vmem [#allocation6], %s2596
        // Predicated region
        $region57: #{cnn_baseline_forward.1} parent=55 // pred_check
          %p2598 = pneg %p235
        $region58: #{cnn_baseline_forward.1} parent=55 // pred_check_branch
          %2600 = sbr.rel (%p2598) target = $region60
        $region59: #{cnn_baseline_forward.1} parent=55 // pred_region
          %s2602 = ssub.s32 16, 16
          %2603 = vsyncadd %s2595, %s2602
          %s2604 = smul.addr %s23, 16
          %s2605 = scalar_lea.hbm %s9, %s2604
          %s2607 = sshll.u32 %s2597, 4
          %s2608 = int_to_ptr.vmem [resolvable:$true] %s2607
          %2610 = dma.vmem_to_hbm [thread:$0]  %s2608, 16, %s2605, %s2595
        $region60: #{cnn_baseline_forward.1} parent=55 // pred_fallthru
          _
      $region56: #{cnn_baseline_forward.1} parent=5 // pred_fallthru
        _
      %p2611 = scmp.le.s32.totalorder 2, %s18
      // Predicated region
      $region61: #{cnn_baseline_forward.1} parent=5 // pred_check
        %p2612 = pneg %p2611
      $region62: #{cnn_baseline_forward.1} parent=5 // pred_check_branch
        %2614 = sbr.rel (%p2612) target = $region64
      $region63: #{cnn_baseline_forward.1} parent=5 // pred_region
        %s2615 = ssub.s32 %s18, 2
        // Predicated region
        $region65: #{cnn_baseline_forward.1} parent=63 // pred_check
          %p2616 = pneg %p241
        $region66: #{cnn_baseline_forward.1} parent=63 // pred_check_branch
          %2618 = sbr.rel (%p2616) target = $region68
        $region67: #{cnn_baseline_forward.1} parent=63 // pred_region
          %s2619 = sand.u32 %s226, 1
          %s2620 = scalar_lea.sflag [#allocation7], %s2619
          %s2621 = sand.u32 %s226, 1
          %s2622 = scalar_lea.vmem [#allocation6], %s2621
          %2623 = dma.done %s2620, 16
        $region68: #{cnn_baseline_forward.1} parent=63 // pred_fallthru
          _
      $region64: #{cnn_baseline_forward.1} parent=5 // pred_fallthru
        _
    $region6: #{cnn_baseline_forward.1} parent=1 // loop_footer
      %s22 = sadd.s32 1, %s18
    $region7: #{cnn_baseline_forward.1} parent=1 // loop_footer_branch
      %17 = sbr.rel target = $region3
    $region8: #{cnn_baseline_forward.1} parent=1 // loop_exit
      _
    %2624 = vsyncpa [#allocation7], 1
    %s2625 = scalar_lea.sflag [#allocation7], 1
    %2626 = vsyncpa %s2625, 1

</llo_original>
